<compile_context>
chip_gen: v7x
topology: tpu7x:2x2x1
jax: 0.10.0
libtpu: 0.0.40
codegen_flags: <defaults>
</compile_context>

<pallas_src>
import functools

import numpy as np
import jax
import jax.numpy as jnp
from jax import lax
from jax.experimental import pallas as pl
from jax.experimental.pallas import tpu as pltpu

BN_EPS = 1e-5
LANE = 128


def _round_up(x, m):
    return (x + m - 1) // m * m


# ---------------------- static helper tables (host-side) -------------------- #

def _nearest_idx(out_len, in_len):
    # nn.Upsample(mode='nearest'): src = floor(dst * in / out)
    return (np.arange(out_len) * in_len) // out_len


def _upsample_matrix(in_hw, out_hw, lp_in, lp_out):
    """Per-image one-hot (lp_in, lp_out) matrix so that `x @ S` is nearest
    upsampling of a row-major flattened (h, w) image.  Pad rows/cols are zero.
    Entries are 0/1 so bf16 storage is exact."""
    h, w = in_hw
    oh, ow = out_hw
    ih = _nearest_idx(oh, h)
    iw = _nearest_idx(ow, w)
    s = np.zeros((lp_in, lp_out), np.float32)
    src = ih[:, None] * w + iw[None, :]
    dst = np.arange(oh)[:, None] * ow + np.arange(ow)[None, :]
    s[src.reshape(-1), dst.reshape(-1)] = 1.0
    return s


def _conv_masks(h, w, lp):
    """(10, lp) 0/1 masks in the per-image lane layout p = y*w + x.
    Rows 0..8: tap (dy, dx) is inside the image AND the lane is a real position
    (replaces zero padding).  Row 9: lane is a real position (masked BN stats)."""
    m = np.zeros((10, lp), np.float32)
    hh = np.arange(h)[:, None]
    ww = np.arange(w)[None, :]
    tap = 0
    for dy in (-1, 0, 1):
        for dx in (-1, 0, 1):
            valid = ((hh + dy >= 0) & (hh + dy < h)
                     & (ww + dx >= 0) & (ww + dx < w)).astype(np.float32)
            m[tap, :h * w] = valid.reshape(-1)
            tap += 1
    m[9, :h * w] = 1.0
    return m


# ------------------------------- fused kernel ------------------------------- #

def _decoder_kernel(*refs, n, c, n_up, n_blocks, widths, counts, eps):
    """refs = [x, up_0..up_{n_up-1}, mask_0..mask_{n_blocks-1},
               wc, gm, bt, wh, bh, out]

    Activations are (N*C, Lp), Lp = pad128(H*W), lanes are per-image spatial.
    """
    f32 = jnp.float32
    bf16 = jnp.bfloat16
    nc = n * c

    x_ref = refs[0]
    up_refs = refs[1:1 + n_up]
    m_refs = refs[1 + n_up:1 + n_up + n_blocks]
    wc_ref, gm_ref, bt_ref, wh_ref, bh_ref = refs[1 + n_up + n_blocks:-1]
    o_ref = refs[-1]

    def conv3x3(x, conv_idx, masks, width):
        # x: (N*C, Lp).  Build the 9 rolled+masked taps, stack them on the
        # sublane axis (each piece is a full 8-row tile for N*C=8) and do the
        # whole Cin*9 -> Cout mixing as ONE MXU matmul against the
        # batch-block-diagonal weight (N*C, 9*N*C).  No conv bias: it is
        # cancelled by the training-mode BatchNorm that follows.
        lp = x.shape[-1]
        taps = []
        tap = 0
        for dy in (-1, 0, 1):
            for dx in (-1, 0, 1):
                d = dy * width + dx                       # per-image lane shift
                if d == 0:
                    xs = x                                # centre tap, no mask
                else:
                    xs = (pltpu.roll(x, (-d) % lp, axis=1)
                          * masks[tap:tap + 1, :])        # zero pad + lane pad
                taps.append(xs)
                tap += 1
        stack = jnp.concatenate(taps, axis=0)             # (9*N*C, Lp)
        return jnp.dot(wc_ref[conv_idx], stack, preferred_element_type=f32)

    def batchnorm(x, blk, valid, inv_cnt):
        # Training-mode batch stats over (N, H, W) per channel, biased variance.
        # One fused masked lane reduction over [x ; x*x]; var = E[x^2] - mean^2.
        stacked = jnp.concatenate([x, x * x], axis=0) * valid     # (2*N*C, Lp)
        s = jnp.sum(stacked, axis=-1, keepdims=True)              # (2*N*C, 1)
        tot, tot2 = s[0:c], s[nc:nc + c]
        for b in range(1, n):                                     # combine images
            tot = tot + s[b * c:(b + 1) * c]
            tot2 = tot2 + s[nc + b * c:nc + (b + 1) * c]
        mean = tot * inv_cnt                                      # (C, 1)
        var = tot2 * inv_cnt - mean * mean
        scale = gm_ref[blk] * lax.rsqrt(var + eps)                # (C, 1)
        shift = bt_ref[blk] - mean * scale                        # (C, 1)
        scale_r = jnp.concatenate([scale] * n, axis=0)            # (N*C, 1)
        shift_r = jnp.concatenate([shift] * n, axis=0)
        return x * scale_r + shift_r                              # single FMA

    def silu(y):
        # exp on the EUP; divide as EUP reciprocal (free slot vs. VPU divide).
        return y * pl.reciprocal(1.0 + jnp.exp(-y), approx=True)

    x = x_ref[...].astype(f32)
    for blk in range(n_blocks):
        if blk < n_up:                                    # nearest upsample (MXU)
            x = jnp.dot(x.astype(bf16), up_refs[blk][...],
                        preferred_element_type=f32)       # bf16 x one-hot bf16
        masks = m_refs[blk][...]
        valid = masks[9:10, :]
        inv_cnt = 1.0 / counts[blk]

        res = x                                           # ResidualBlockOrig
        out = conv3x3(x, 2 * blk, masks, widths[blk])
        out = silu(batchnorm(out, blk, valid, inv_cnt))
        out = conv3x3(out, 2 * blk + 1, masks, widths[blk])
        out = batchnorm(out, blk, valid, inv_cnt) + res
        x = silu(out)

    # 1x1 head conv: batch-block-diagonal (N*Cout, N*C) matmul + bias.
    y = jnp.dot(wh_ref[...], x, preferred_element_type=f32) + bh_ref[...]
    o_ref[...] = y.astype(o_ref.dtype)


# --------------------------------- wrapper ---------------------------------- #

def _full_spec(shape):
    nd = len(shape)
    return pl.BlockSpec(shape, lambda i, _nd=nd: (0,) * _nd)


def com_decoder_forward(x_nchw, params, hidden_sizes, kernel_size=3):
    """x_nchw: (N, Cin, H, W) float32 -> (N, num_output_channels, OH, OW)."""
    assert kernel_size == 3, "kernel specialised for the module's 3x3 convs"
    n, cin, h, w = x_nchw.shape
    blocks = params["blocks"]
    n_blocks = len(blocks)
    n_up = len(hidden_sizes)
    c = blocks[0]["w1"].shape[0]
    cout = params["head_w"].shape[0]
    assert cin == c, "block-0 residual add requires in_channels == num_channels"
    assert n_up >= 1

    sizes = [(h, w)] + [tuple(s) for s in hidden_sizes]
    blk_hw = [sizes[min(i + 1, n_up)] for i in range(n_blocks)]
    widths = tuple(hw[1] for hw in blk_hw)
    counts = tuple(float(n * hw[0] * hw[1]) for hw in blk_hw)
    lp_in = _round_up(h * w, LANE)
    lps = [_round_up(hw[0] * hw[1], LANE) for hw in blk_hw]

    # per-image one-hot upsample matrices (bf16, 0/1 exact) + boundary/pad masks
    ups, prev_lp, prev_hw = [], lp_in, sizes[0]
    for i in range(n_up):
        ups.append(jnp.asarray(
            _upsample_matrix(prev_hw, sizes[i + 1], prev_lp, lps[i]),
            dtype=jnp.bfloat16))
        prev_lp, prev_hw = lps[i], sizes[i + 1]
    masks = [jnp.asarray(_conv_masks(blk_hw[i][0], blk_hw[i][1], lps[i]))
             for i in range(n_blocks)]

    # batch-block-diagonal conv weights: one (N*C, 9*N*C) MXU matmul per conv.
    eye_n = jnp.eye(n, dtype=jnp.float32)

    def pack_conv(wt):                  # (Cout, Cin, 3, 3) -> (N*Cout, 9*N*Cin)
        co, ci = wt.shape[0], wt.shape[1]
        w9 = jnp.transpose(wt, (2, 3, 0, 1)).reshape(9, co, ci)   # (tap, co, ci)
        big = jnp.einsum('toi,nm->notmi', w9, eye_n)
        return big.reshape(n * co, 9 * n * ci)

    wc = jnp.stack([pack_conv(b[k]) for b in blocks for k in ("w1", "w2")])
    # conv1/conv2 biases intentionally dropped (cancelled by training-mode BN)
    gm = jnp.stack([b["gamma"].reshape(-1, 1) for b in blocks])
    bt = jnp.stack([b["beta"].reshape(-1, 1) for b in blocks])
    wh = jnp.einsum('oi,nm->nomi', params["head_w"].reshape(cout, c),
                    eye_n).reshape(n * cout, n * c)
    bh = jnp.tile(params["head_b"], (n,)).reshape(-1, 1)

    # NCHW -> (N*Cin, H*W) is a FREE reshape (no transpose); pad lanes to 128.
    x2d = x_nchw.reshape(n * cin, h * w)
    if lp_in > h * w:
        x2d = jnp.pad(x2d, ((0, 0), (0, lp_in - h * w)))
    x2d = x2d.astype(jnp.float32)

    inputs = [x2d] + ups + masks + [wc, gm, bt, wh, bh]
    kernel = functools.partial(_decoder_kernel, n=n, c=c, n_up=n_up,
                               n_blocks=n_blocks, widths=widths,
                               counts=counts, eps=BN_EPS)

    out = pl.pallas_call(
        kernel,
        out_shape=jax.ShapeDtypeStruct((n * cout, lps[-1]), jnp.float32),
        grid=(1,),
        in_specs=[_full_spec(a.shape) for a in inputs],
        out_specs=_full_spec((n * cout, lps[-1])),
        compiler_params=pltpu.CompilerParams(
            dimension_semantics=("arbitrary",)),
    )(*inputs)

    oh, ow = blk_hw[-1]
    out = out[:, :oh * ow]                       # drop lane padding (no-op here)
    return out.reshape(n, cout, oh, ow).astype(x_nchw.dtype)   # free reshape


# ------------------------------ params / config ----------------------------- #

def _conv_init(key, k, cin, cout):
    kw, kb = jax.random.split(key)
    bound = 1.0 / np.sqrt(cin * k * k)
    wgt = jax.random.uniform(kw, (cout, cin, k, k), jnp.float32, -bound, bound)
    b = jax.random.uniform(kb, (cout,), jnp.float32, -bound, bound)
    return wgt, b


def init_params(key, num_layers, cin, c, cout_final, k):
    num_blocks = num_layers        # (num_layers-1) upsampled blocks + 1 trailing
    keys = jax.random.split(key, num_blocks + 1)
    blocks = []
    for i in range(num_blocks):
        in_f = cin if i == 0 else c
        k1, k2 = jax.random.split(keys[i])
        w1, b1 = _conv_init(k1, k, in_f, c)
        w2, b2 = _conv_init(k2, k, c, c)
        blocks.append(dict(w1=w1, b1=b1, w2=w2, b2=b2,
                           gamma=jnp.ones((c,), jnp.float32),
                           beta=jnp.zeros((c,), jnp.float32)))
    head_w, head_b = _conv_init(keys[-1], 1, c, cout_final)
    return dict(blocks=blocks, head_w=head_w, head_b=head_b)


def compute_hidden_sizes(num_layers, in_size, out_size):
    sx = (out_size[0] / in_size[0]) ** (1.0 / (num_layers - 1))
    sy = (out_size[1] / in_size[1]) ** (1.0 / (num_layers - 1))
    return [(int(np.ceil(sx ** nn * in_size[0])),
             int(np.ceil(sy ** nn * in_size[1])))
            for nn in range(1, num_layers - 1)] + [tuple(out_size)]


# ---------------------- pure-JAX reference (sanity check) ------------------- #

def _ref_forward(x, params, hidden_sizes):
    def upsample(t, size):
        _, _, hh, ww = t.shape
        oh, ow = size
        return t[:, :, _nearest_idx(oh, hh), :][:, :, :, _nearest_idx(ow, ww)]

    def conv(t, wt, bias):
        nn_, _, hh, ww = t.shape
        co, _, kh, kw = wt.shape
        ph, pw = (kh - 1) // 2, (kw - 1) // 2
        tp = jnp.pad(t, ((0, 0), (0, 0), (ph, ph), (pw, pw)))
        acc = jnp.zeros((nn_, co, hh, ww), jnp.float32)
        for ky in range(kh):
            for kx in range(kw):
                patch = tp[:, :, ky:ky + hh, kx:kx + ww]
                acc = acc + jnp.sum(wt[None, :, :, ky, kx, None, None]
                                    * patch[:, None], axis=2)
        return acc + bias[None, :, None, None]

    def bn(t, g, b):
        mean = jnp.mean(t, axis=(0, 2, 3), keepdims=True)
        var = jnp.mean((t - mean) ** 2, axis=(0, 2, 3), keepdims=True)
        return ((t - mean) * jax.lax.rsqrt(var + BN_EPS)
                * g[None, :, None, None] + b[None, :, None, None])

    def silu(t):
        return t * (1.0 / (1.0 + jnp.exp(-t)))

    n_up = len(hidden_sizes)
    for i, p in enumerate(params["blocks"]):
        if i < n_up:
            x = upsample(x, hidden_sizes[i])
        res = x
        out = silu(bn(conv(x, p["w1"], p["b1"]), p["gamma"], p["beta"]))
        out = bn(conv(out, p["w2"], p["b2"]), p["gamma"], p["beta"]) + res
        x = silu(out)
    return conv(x, params["head_w"], params["head_b"])


# ------------------------------------ main ----------------------------------- #

if __name__ == "__main__":
    num_layers = 3
    num_input_channels = 4   # equals num_channels so the residual add matches PyTorch
    num_channels = 4
    num_output_channels = 3
    in_size = (8, 8)
    out_size = (16, 16)
    kernel_size = 3
    # upsample_mode = 'nearest'

    hidden_sizes = compute_hidden_sizes(num_layers, in_size, out_size)  # [(12,12),(16,16)]

    key = jax.random.PRNGKey(0)
    kx, kp = jax.random.split(key)
    params = init_params(kp, num_layers, num_input_channels, num_channels,
                         num_output_channels, kernel_size)
    x = jax.random.normal(kx, (2, num_input_channels, *in_size), jnp.float32)

    fwd = jax.jit(lambda xx, pp: com_decoder_forward(xx, pp, hidden_sizes,
                                                     kernel_size))
    y = jax.block_until_ready(fwd(x, params))
    assert y.shape == (2, num_output_channels, *out_size), y.shape
    assert bool(jnp.all(jnp.isfinite(y)))

    # numerical sanity check vs. a pure-JAX/XLA reference of the PyTorch module
    # (loose tolerance: bf16 one-hot upsample + default-precision MXU conv mix)
    y_ref = jax.block_until_ready(_ref_forward(x, params, hidden_sizes))
    np.testing.assert_allclose(np.asarray(y), np.asarray(y_ref),
                               rtol=3e-2, atol=3e-2)

    print("KERNEL_OK")
</pallas_src>

<mosaic_0001>
module attributes {stable_mosaic.version = 11 : i64} {
  func.func @_decoder_kernel(%arg0: i32, %arg1: memref<8x128xf32, #tpu.memory_space<vmem>>, %arg2: memref<128x256xbf16, #tpu.memory_space<vmem>>, %arg3: memref<256x256xbf16, #tpu.memory_space<vmem>>, %arg4: memref<10x256xf32, #tpu.memory_space<vmem>>, %arg5: memref<10x256xf32, #tpu.memory_space<vmem>>, %arg6: memref<10x256xf32, #tpu.memory_space<vmem>>, %arg7: memref<6x8x72xf32, #tpu.memory_space<vmem>>, %arg8: memref<3x4x1xf32, #tpu.memory_space<vmem>>, %arg9: memref<3x4x1xf32, #tpu.memory_space<vmem>>, %arg10: memref<6x8xf32, #tpu.memory_space<vmem>>, %arg11: memref<6x1xf32, #tpu.memory_space<vmem>>, %arg12: memref<6x256xf32, #tpu.memory_space<vmem>>) attributes {dimension_semantics = [#tpu.dimension_semantics<arbitrary>], iteration_bounds = array<i64: 1>, scalar_prefetch = 0 : i64, scratch_operands = 0 : i64, tpu.core_type = #tpu.core_type<tc>, window_params = [{pipeline_mode = #tpu.pipeline_mode<synchronous>, transform_indices = @transform_0, window_bounds = array<i64: 8, 128>}, {pipeline_mode = #tpu.pipeline_mode<synchronous>, transform_indices = @transform_1, window_bounds = array<i64: 128, 256>}, {pipeline_mode = #tpu.pipeline_mode<synchronous>, transform_indices = @transform_2, window_bounds = array<i64: 256, 256>}, {pipeline_mode = #tpu.pipeline_mode<synchronous>, transform_indices = @transform_3, window_bounds = array<i64: 10, 256>}, {pipeline_mode = #tpu.pipeline_mode<synchronous>, transform_indices = @transform_4, window_bounds = array<i64: 10, 256>}, {pipeline_mode = #tpu.pipeline_mode<synchronous>, transform_indices = @transform_5, window_bounds = array<i64: 10, 256>}, {pipeline_mode = #tpu.pipeline_mode<synchronous>, transform_indices = @transform_6, window_bounds = array<i64: 6, 8, 72>}, {pipeline_mode = #tpu.pipeline_mode<synchronous>, transform_indices = @transform_7, window_bounds = array<i64: 3, 4, 1>}, {pipeline_mode = #tpu.pipeline_mode<synchronous>, transform_indices = @transform_8, window_bounds = array<i64: 3, 4, 1>}, {pipeline_mode = #tpu.pipeline_mode<synchronous>, transform_indices = @transform_9, window_bounds = array<i64: 6, 8>}, {pipeline_mode = #tpu.pipeline_mode<synchronous>, transform_indices = @transform_10, window_bounds = array<i64: 6, 1>}, {pipeline_mode = #tpu.pipeline_mode<synchronous>, transform_indices = @transform_11, window_bounds = array<i64: 6, 256>}]} {
    %c0 = arith.constant 0 : index
    %c0_0 = arith.constant 0 : index
    %0 = vector.load %arg1[%c0, %c0_0] : memref<8x128xf32, #tpu.memory_space<vmem>>, vector<8x128xf32>
    %1 = arith.truncf %0 : vector<8x128xf32> to vector<8x128xbf16>
    %c0_1 = arith.constant 0 : index
    %c0_2 = arith.constant 0 : index
    %2 = vector.load %arg2[%c0_1, %c0_2] : memref<128x256xbf16, #tpu.memory_space<vmem>>, vector<128x256xbf16>
    %cst = arith.constant dense<0.000000e+00> : vector<8x256xf32>
    %3 = tpu.matmul %1, %2, %cst {dimension_numbers = #tpu.dot_dimension_numbers<[1], [0], [0], [1], [0, 0, 1, 1], [], []>} : vector<8x128xbf16>, vector<128x256xbf16>, vector<8x256xf32> -> vector<8x256xf32>
    %c0_3 = arith.constant 0 : index
    %c0_4 = arith.constant 0 : index
    %4 = vector.load %arg4[%c0_3, %c0_4] : memref<10x256xf32, #tpu.memory_space<vmem>>, vector<10x256xf32>
    %5 = vector.extract_strided_slice %4 {offsets = [9, 0], sizes = [1, 256], strides = [1, 1]} : vector<10x256xf32> to vector<1x256xf32>
    %c13_i32 = arith.constant 13 : i32
    %6 = tpu.dynamic_rotate %3 by %c13_i32 dim 1 : vector<8x256xf32>, i32 -> vector<8x256xf32>
    %7 = vector.extract_strided_slice %4 {offsets = [0, 0], sizes = [1, 256], strides = [1, 1]} : vector<10x256xf32> to vector<1x256xf32>
    %8 = vector.broadcast %7 : vector<1x256xf32> to vector<8x256xf32>
    %9 = arith.mulf %6, %8 : vector<8x256xf32>
    %c12_i32 = arith.constant 12 : i32
    %10 = tpu.dynamic_rotate %3 by %c12_i32 dim 1 : vector<8x256xf32>, i32 -> vector<8x256xf32>
    %11 = vector.extract_strided_slice %4 {offsets = [1, 0], sizes = [1, 256], strides = [1, 1]} : vector<10x256xf32> to vector<1x256xf32>
    %12 = vector.broadcast %11 : vector<1x256xf32> to vector<8x256xf32>
    %13 = arith.mulf %10, %12 : vector<8x256xf32>
    %c11_i32 = arith.constant 11 : i32
    %14 = tpu.dynamic_rotate %3 by %c11_i32 dim 1 : vector<8x256xf32>, i32 -> vector<8x256xf32>
    %15 = vector.extract_strided_slice %4 {offsets = [2, 0], sizes = [1, 256], strides = [1, 1]} : vector<10x256xf32> to vector<1x256xf32>
    %16 = vector.broadcast %15 : vector<1x256xf32> to vector<8x256xf32>
    %17 = arith.mulf %14, %16 : vector<8x256xf32>
    %c1_i32 = arith.constant 1 : i32
    %18 = tpu.dynamic_rotate %3 by %c1_i32 dim 1 : vector<8x256xf32>, i32 -> vector<8x256xf32>
    %19 = vector.extract_strided_slice %4 {offsets = [3, 0], sizes = [1, 256], strides = [1, 1]} : vector<10x256xf32> to vector<1x256xf32>
    %20 = vector.broadcast %19 : vector<1x256xf32> to vector<8x256xf32>
    %21 = arith.mulf %18, %20 : vector<8x256xf32>
    %c255_i32 = arith.constant 255 : i32
    %22 = tpu.dynamic_rotate %3 by %c255_i32 dim 1 : vector<8x256xf32>, i32 -> vector<8x256xf32>
    %23 = vector.extract_strided_slice %4 {offsets = [5, 0], sizes = [1, 256], strides = [1, 1]} : vector<10x256xf32> to vector<1x256xf32>
    %24 = vector.broadcast %23 : vector<1x256xf32> to vector<8x256xf32>
    %25 = arith.mulf %22, %24 : vector<8x256xf32>
    %c245_i32 = arith.constant 245 : i32
    %26 = tpu.dynamic_rotate %3 by %c245_i32 dim 1 : vector<8x256xf32>, i32 -> vector<8x256xf32>
    %27 = vector.extract_strided_slice %4 {offsets = [6, 0], sizes = [1, 256], strides = [1, 1]} : vector<10x256xf32> to vector<1x256xf32>
    %28 = vector.broadcast %27 : vector<1x256xf32> to vector<8x256xf32>
    %29 = arith.mulf %26, %28 : vector<8x256xf32>
    %c244_i32 = arith.constant 244 : i32
    %30 = tpu.dynamic_rotate %3 by %c244_i32 dim 1 : vector<8x256xf32>, i32 -> vector<8x256xf32>
    %31 = vector.extract_strided_slice %4 {offsets = [7, 0], sizes = [1, 256], strides = [1, 1]} : vector<10x256xf32> to vector<1x256xf32>
    %32 = vector.broadcast %31 : vector<1x256xf32> to vector<8x256xf32>
    %33 = arith.mulf %30, %32 : vector<8x256xf32>
    %c243_i32 = arith.constant 243 : i32
    %34 = tpu.dynamic_rotate %3 by %c243_i32 dim 1 : vector<8x256xf32>, i32 -> vector<8x256xf32>
    %35 = vector.extract_strided_slice %4 {offsets = [8, 0], sizes = [1, 256], strides = [1, 1]} : vector<10x256xf32> to vector<1x256xf32>
    %36 = vector.broadcast %35 : vector<1x256xf32> to vector<8x256xf32>
    %37 = arith.mulf %34, %36 : vector<8x256xf32>
    %38 = tpu.concatenate %9, %13, %17, %21, %3, %25, %29, %33, %37 in 0 : vector<8x256xf32>, vector<8x256xf32>, vector<8x256xf32>, vector<8x256xf32>, vector<8x256xf32>, vector<8x256xf32>, vector<8x256xf32>, vector<8x256xf32>, vector<8x256xf32> -> vector<72x256xf32>
    %c0_5 = arith.constant 0 : index
    %c0_6 = arith.constant 0 : index
    %c0_7 = arith.constant 0 : index
    %39 = vector.load %arg7[%c0_5, %c0_6, %c0_7] : memref<6x8x72xf32, #tpu.memory_space<vmem>>, vector<1x8x72xf32>
    %40 = vector.shape_cast %39 : vector<1x8x72xf32> to vector<8x72xf32>
    %cst_8 = arith.constant dense<0.000000e+00> : vector<8x256xf32>
    %41 = tpu.matmul %40, %38, %cst_8 {dimension_numbers = #tpu.dot_dimension_numbers<[1], [0], [0], [1], [0, 0, 1, 1], [], []>} : vector<8x72xf32>, vector<72x256xf32>, vector<8x256xf32> -> vector<8x256xf32>
    %42 = arith.mulf %41, %41 : vector<8x256xf32>
    %43 = tpu.concatenate %41, %42 in 0 : vector<8x256xf32>, vector<8x256xf32> -> vector<16x256xf32>
    %44 = vector.broadcast %5 : vector<1x256xf32> to vector<16x256xf32>
    %45 = arith.mulf %43, %44 : vector<16x256xf32>
    %cst_9 = arith.constant dense<0.000000e+00> : vector<16xf32>
    %46 = vector.multi_reduction <add>, %45, %cst_9 [1] : vector<16x256xf32> to vector<16xf32>
    %47 = vector.shape_cast %46 : vector<16xf32> to vector<16x1xf32>
    %48 = vector.extract_strided_slice %47 {offsets = [0, 0], sizes = [4, 1], strides = [1, 1]} : vector<16x1xf32> to vector<4x1xf32>
    %49 = vector.extract_strided_slice %47 {offsets = [8, 0], sizes = [4, 1], strides = [1, 1]} : vector<16x1xf32> to vector<4x1xf32>
    %50 = vector.extract_strided_slice %47 {offsets = [4, 0], sizes = [4, 1], strides = [1, 1]} : vector<16x1xf32> to vector<4x1xf32>
    %51 = arith.addf %48, %50 : vector<4x1xf32>
    %52 = vector.extract_strided_slice %47 {offsets = [12, 0], sizes = [4, 1], strides = [1, 1]} : vector<16x1xf32> to vector<4x1xf32>
    %53 = arith.addf %49, %52 : vector<4x1xf32>
    %cst_10 = arith.constant 0.00347222225 : f32
    %54 = vector.broadcast %cst_10 : f32 to vector<4x1xf32>
    %55 = arith.mulf %51, %54 : vector<4x1xf32>
    %cst_11 = arith.constant 0.00347222225 : f32
    %56 = vector.broadcast %cst_11 : f32 to vector<4x1xf32>
    %57 = arith.mulf %53, %56 : vector<4x1xf32>
    %58 = arith.mulf %55, %55 : vector<4x1xf32>
    %59 = arith.subf %57, %58 : vector<4x1xf32>
    %c0_12 = arith.constant 0 : index
    %c0_13 = arith.constant 0 : index
    %c0_14 = arith.constant 0 : index
    %60 = vector.load %arg8[%c0_12, %c0_13, %c0_14] : memref<3x4x1xf32, #tpu.memory_space<vmem>>, vector<1x4x1xf32>
    %61 = vector.shape_cast %60 : vector<1x4x1xf32> to vector<4x1xf32>
    %cst_15 = arith.constant 9.99999974E-6 : f32
    %62 = vector.broadcast %cst_15 : f32 to vector<4x1xf32>
    %63 = arith.addf %59, %62 : vector<4x1xf32>
    %64 = math.rsqrt %63 : vector<4x1xf32>
    %65 = arith.mulf %61, %64 : vector<4x1xf32>
    %c0_16 = arith.constant 0 : index
    %c0_17 = arith.constant 0 : index
    %c0_18 = arith.constant 0 : index
    %66 = vector.load %arg9[%c0_16, %c0_17, %c0_18] : memref<3x4x1xf32, #tpu.memory_space<vmem>>, vector<1x4x1xf32>
    %67 = vector.shape_cast %66 : vector<1x4x1xf32> to vector<4x1xf32>
    %68 = arith.mulf %55, %65 : vector<4x1xf32>
    %69 = arith.subf %67, %68 : vector<4x1xf32>
    %70 = tpu.concatenate %65, %65 in 0 : vector<4x1xf32>, vector<4x1xf32> -> vector<8x1xf32>
    %71 = tpu.concatenate %69, %69 in 0 : vector<4x1xf32>, vector<4x1xf32> -> vector<8x1xf32>
    %72 = vector.broadcast %70 : vector<8x1xf32> to vector<8x256xf32>
    %73 = arith.mulf %41, %72 : vector<8x256xf32>
    %74 = vector.broadcast %71 : vector<8x1xf32> to vector<8x256xf32>
    %75 = arith.addf %73, %74 : vector<8x256xf32>
    %cst_19 = arith.constant 0.000000e+00 : f32
    %76 = vector.broadcast %cst_19 : f32 to vector<8x256xf32>
    %77 = arith.subf %76, %75 : vector<8x256xf32>
    %78 = math.exp %77 : vector<8x256xf32>
    %cst_20 = arith.constant 1.000000e+00 : f32
    %79 = vector.broadcast %cst_20 : f32 to vector<8x256xf32>
    %80 = arith.addf %79, %78 : vector<8x256xf32>
    %81 = tpu.reciprocal %80 {approx = true} : vector<8x256xf32> -> vector<8x256xf32>
    %82 = arith.mulf %75, %81 : vector<8x256xf32>
    %c13_i32_21 = arith.constant 13 : i32
    %83 = tpu.dynamic_rotate %82 by %c13_i32_21 dim 1 : vector<8x256xf32>, i32 -> vector<8x256xf32>
    %84 = vector.extract_strided_slice %4 {offsets = [0, 0], sizes = [1, 256], strides = [1, 1]} : vector<10x256xf32> to vector<1x256xf32>
    %85 = vector.broadcast %84 : vector<1x256xf32> to vector<8x256xf32>
    %86 = arith.mulf %83, %85 : vector<8x256xf32>
    %c12_i32_22 = arith.constant 12 : i32
    %87 = tpu.dynamic_rotate %82 by %c12_i32_22 dim 1 : vector<8x256xf32>, i32 -> vector<8x256xf32>
    %88 = vector.extract_strided_slice %4 {offsets = [1, 0], sizes = [1, 256], strides = [1, 1]} : vector<10x256xf32> to vector<1x256xf32>
    %89 = vector.broadcast %88 : vector<1x256xf32> to vector<8x256xf32>
    %90 = arith.mulf %87, %89 : vector<8x256xf32>
    %c11_i32_23 = arith.constant 11 : i32
    %91 = tpu.dynamic_rotate %82 by %c11_i32_23 dim 1 : vector<8x256xf32>, i32 -> vector<8x256xf32>
    %92 = vector.extract_strided_slice %4 {offsets = [2, 0], sizes = [1, 256], strides = [1, 1]} : vector<10x256xf32> to vector<1x256xf32>
    %93 = vector.broadcast %92 : vector<1x256xf32> to vector<8x256xf32>
    %94 = arith.mulf %91, %93 : vector<8x256xf32>
    %c1_i32_24 = arith.constant 1 : i32
    %95 = tpu.dynamic_rotate %82 by %c1_i32_24 dim 1 : vector<8x256xf32>, i32 -> vector<8x256xf32>
    %96 = vector.extract_strided_slice %4 {offsets = [3, 0], sizes = [1, 256], strides = [1, 1]} : vector<10x256xf32> to vector<1x256xf32>
    %97 = vector.broadcast %96 : vector<1x256xf32> to vector<8x256xf32>
    %98 = arith.mulf %95, %97 : vector<8x256xf32>
    %c255_i32_25 = arith.constant 255 : i32
    %99 = tpu.dynamic_rotate %82 by %c255_i32_25 dim 1 : vector<8x256xf32>, i32 -> vector<8x256xf32>
    %100 = vector.extract_strided_slice %4 {offsets = [5, 0], sizes = [1, 256], strides = [1, 1]} : vector<10x256xf32> to vector<1x256xf32>
    %101 = vector.broadcast %100 : vector<1x256xf32> to vector<8x256xf32>
    %102 = arith.mulf %99, %101 : vector<8x256xf32>
    %c245_i32_26 = arith.constant 245 : i32
    %103 = tpu.dynamic_rotate %82 by %c245_i32_26 dim 1 : vector<8x256xf32>, i32 -> vector<8x256xf32>
    %104 = vector.extract_strided_slice %4 {offsets = [6, 0], sizes = [1, 256], strides = [1, 1]} : vector<10x256xf32> to vector<1x256xf32>
    %105 = vector.broadcast %104 : vector<1x256xf32> to vector<8x256xf32>
    %106 = arith.mulf %103, %105 : vector<8x256xf32>
    %c244_i32_27 = arith.constant 244 : i32
    %107 = tpu.dynamic_rotate %82 by %c244_i32_27 dim 1 : vector<8x256xf32>, i32 -> vector<8x256xf32>
    %108 = vector.extract_strided_slice %4 {offsets = [7, 0], sizes = [1, 256], strides = [1, 1]} : vector<10x256xf32> to vector<1x256xf32>
    %109 = vector.broadcast %108 : vector<1x256xf32> to vector<8x256xf32>
    %110 = arith.mulf %107, %109 : vector<8x256xf32>
    %c243_i32_28 = arith.constant 243 : i32
    %111 = tpu.dynamic_rotate %82 by %c243_i32_28 dim 1 : vector<8x256xf32>, i32 -> vector<8x256xf32>
    %112 = vector.extract_strided_slice %4 {offsets = [8, 0], sizes = [1, 256], strides = [1, 1]} : vector<10x256xf32> to vector<1x256xf32>
    %113 = vector.broadcast %112 : vector<1x256xf32> to vector<8x256xf32>
    %114 = arith.mulf %111, %113 : vector<8x256xf32>
    %115 = tpu.concatenate %86, %90, %94, %98, %82, %102, %106, %110, %114 in 0 : vector<8x256xf32>, vector<8x256xf32>, vector<8x256xf32>, vector<8x256xf32>, vector<8x256xf32>, vector<8x256xf32>, vector<8x256xf32>, vector<8x256xf32>, vector<8x256xf32> -> vector<72x256xf32>
    %c1 = arith.constant 1 : index
    %c0_29 = arith.constant 0 : index
    %c0_30 = arith.constant 0 : index
    %116 = vector.load %arg7[%c1, %c0_29, %c0_30] : memref<6x8x72xf32, #tpu.memory_space<vmem>>, vector<1x8x72xf32>
    %117 = vector.shape_cast %116 : vector<1x8x72xf32> to vector<8x72xf32>
    %cst_31 = arith.constant dense<0.000000e+00> : vector<8x256xf32>
    %118 = tpu.matmul %117, %115, %cst_31 {dimension_numbers = #tpu.dot_dimension_numbers<[1], [0], [0], [1], [0, 0, 1, 1], [], []>} : vector<8x72xf32>, vector<72x256xf32>, vector<8x256xf32> -> vector<8x256xf32>
    %119 = arith.mulf %118, %118 : vector<8x256xf32>
    %120 = tpu.concatenate %118, %119 in 0 : vector<8x256xf32>, vector<8x256xf32> -> vector<16x256xf32>
    %121 = vector.broadcast %5 : vector<1x256xf32> to vector<16x256xf32>
    %122 = arith.mulf %120, %121 : vector<16x256xf32>
    %cst_32 = arith.constant dense<0.000000e+00> : vector<16xf32>
    %123 = vector.multi_reduction <add>, %122, %cst_32 [1] : vector<16x256xf32> to vector<16xf32>
    %124 = vector.shape_cast %123 : vector<16xf32> to vector<16x1xf32>
    %125 = vector.extract_strided_slice %124 {offsets = [0, 0], sizes = [4, 1], strides = [1, 1]} : vector<16x1xf32> to vector<4x1xf32>
    %126 = vector.extract_strided_slice %124 {offsets = [8, 0], sizes = [4, 1], strides = [1, 1]} : vector<16x1xf32> to vector<4x1xf32>
    %127 = vector.extract_strided_slice %124 {offsets = [4, 0], sizes = [4, 1], strides = [1, 1]} : vector<16x1xf32> to vector<4x1xf32>
    %128 = arith.addf %125, %127 : vector<4x1xf32>
    %129 = vector.extract_strided_slice %124 {offsets = [12, 0], sizes = [4, 1], strides = [1, 1]} : vector<16x1xf32> to vector<4x1xf32>
    %130 = arith.addf %126, %129 : vector<4x1xf32>
    %cst_33 = arith.constant 0.00347222225 : f32
    %131 = vector.broadcast %cst_33 : f32 to vector<4x1xf32>
    %132 = arith.mulf %128, %131 : vector<4x1xf32>
    %cst_34 = arith.constant 0.00347222225 : f32
    %133 = vector.broadcast %cst_34 : f32 to vector<4x1xf32>
    %134 = arith.mulf %130, %133 : vector<4x1xf32>
    %135 = arith.mulf %132, %132 : vector<4x1xf32>
    %136 = arith.subf %134, %135 : vector<4x1xf32>
    %c0_35 = arith.constant 0 : index
    %c0_36 = arith.constant 0 : index
    %c0_37 = arith.constant 0 : index
    %137 = vector.load %arg8[%c0_35, %c0_36, %c0_37] : memref<3x4x1xf32, #tpu.memory_space<vmem>>, vector<1x4x1xf32>
    %138 = vector.shape_cast %137 : vector<1x4x1xf32> to vector<4x1xf32>
    %cst_38 = arith.constant 9.99999974E-6 : f32
    %139 = vector.broadcast %cst_38 : f32 to vector<4x1xf32>
    %140 = arith.addf %136, %139 : vector<4x1xf32>
    %141 = math.rsqrt %140 : vector<4x1xf32>
    %142 = arith.mulf %138, %141 : vector<4x1xf32>
    %c0_39 = arith.constant 0 : index
    %c0_40 = arith.constant 0 : index
    %c0_41 = arith.constant 0 : index
    %143 = vector.load %arg9[%c0_39, %c0_40, %c0_41] : memref<3x4x1xf32, #tpu.memory_space<vmem>>, vector<1x4x1xf32>
    %144 = vector.shape_cast %143 : vector<1x4x1xf32> to vector<4x1xf32>
    %145 = arith.mulf %132, %142 : vector<4x1xf32>
    %146 = arith.subf %144, %145 : vector<4x1xf32>
    %147 = tpu.concatenate %142, %142 in 0 : vector<4x1xf32>, vector<4x1xf32> -> vector<8x1xf32>
    %148 = tpu.concatenate %146, %146 in 0 : vector<4x1xf32>, vector<4x1xf32> -> vector<8x1xf32>
    %149 = vector.broadcast %147 : vector<8x1xf32> to vector<8x256xf32>
    %150 = arith.mulf %118, %149 : vector<8x256xf32>
    %151 = vector.broadcast %148 : vector<8x1xf32> to vector<8x256xf32>
    %152 = arith.addf %150, %151 : vector<8x256xf32>
    %153 = arith.addf %152, %3 : vector<8x256xf32>
    %cst_42 = arith.constant 0.000000e+00 : f32
    %154 = vector.broadcast %cst_42 : f32 to vector<8x256xf32>
    %155 = arith.subf %154, %153 : vector<8x256xf32>
    %156 = math.exp %155 : vector<8x256xf32>
    %cst_43 = arith.constant 1.000000e+00 : f32
    %157 = vector.broadcast %cst_43 : f32 to vector<8x256xf32>
    %158 = arith.addf %157, %156 : vector<8x256xf32>
    %159 = tpu.reciprocal %158 {approx = true} : vector<8x256xf32> -> vector<8x256xf32>
    %160 = arith.mulf %153, %159 : vector<8x256xf32>
    %161 = arith.truncf %160 : vector<8x256xf32> to vector<8x256xbf16>
    %c0_44 = arith.constant 0 : index
    %c0_45 = arith.constant 0 : index
    %162 = vector.load %arg3[%c0_44, %c0_45] : memref<256x256xbf16, #tpu.memory_space<vmem>>, vector<256x256xbf16>
    %cst_46 = arith.constant dense<0.000000e+00> : vector<8x256xf32>
    %163 = tpu.matmul %161, %162, %cst_46 {dimension_numbers = #tpu.dot_dimension_numbers<[1], [0], [0], [1], [0, 0, 1, 1], [], []>} : vector<8x256xbf16>, vector<256x256xbf16>, vector<8x256xf32> -> vector<8x256xf32>
    %c0_47 = arith.constant 0 : index
    %c0_48 = arith.constant 0 : index
    %164 = vector.load %arg5[%c0_47, %c0_48] : memref<10x256xf32, #tpu.memory_space<vmem>>, vector<10x256xf32>
    %165 = vector.extract_strided_slice %164 {offsets = [9, 0], sizes = [1, 256], strides = [1, 1]} : vector<10x256xf32> to vector<1x256xf32>
    %c17_i32 = arith.constant 17 : i32
    %166 = tpu.dynamic_rotate %163 by %c17_i32 dim 1 : vector<8x256xf32>, i32 -> vector<8x256xf32>
    %167 = vector.extract_strided_slice %164 {offsets = [0, 0], sizes = [1, 256], strides = [1, 1]} : vector<10x256xf32> to vector<1x256xf32>
    %168 = vector.broadcast %167 : vector<1x256xf32> to vector<8x256xf32>
    %169 = arith.mulf %166, %168 : vector<8x256xf32>
    %c16_i32 = arith.constant 16 : i32
    %170 = tpu.dynamic_rotate %163 by %c16_i32 dim 1 : vector<8x256xf32>, i32 -> vector<8x256xf32>
    %171 = vector.extract_strided_slice %164 {offsets = [1, 0], sizes = [1, 256], strides = [1, 1]} : vector<10x256xf32> to vector<1x256xf32>
    %172 = vector.broadcast %171 : vector<1x256xf32> to vector<8x256xf32>
    %173 = arith.mulf %170, %172 : vector<8x256xf32>
    %c15_i32 = arith.constant 15 : i32
    %174 = tpu.dynamic_rotate %163 by %c15_i32 dim 1 : vector<8x256xf32>, i32 -> vector<8x256xf32>
    %175 = vector.extract_strided_slice %164 {offsets = [2, 0], sizes = [1, 256], strides = [1, 1]} : vector<10x256xf32> to vector<1x256xf32>
    %176 = vector.broadcast %175 : vector<1x256xf32> to vector<8x256xf32>
    %177 = arith.mulf %174, %176 : vector<8x256xf32>
    %c1_i32_49 = arith.constant 1 : i32
    %178 = tpu.dynamic_rotate %163 by %c1_i32_49 dim 1 : vector<8x256xf32>, i32 -> vector<8x256xf32>
    %179 = vector.extract_strided_slice %164 {offsets = [3, 0], sizes = [1, 256], strides = [1, 1]} : vector<10x256xf32> to vector<1x256xf32>
    %180 = vector.broadcast %179 : vector<1x256xf32> to vector<8x256xf32>
    %181 = arith.mulf %178, %180 : vector<8x256xf32>
    %c255_i32_50 = arith.constant 255 : i32
    %182 = tpu.dynamic_rotate %163 by %c255_i32_50 dim 1 : vector<8x256xf32>, i32 -> vector<8x256xf32>
    %183 = vector.extract_strided_slice %164 {offsets = [5, 0], sizes = [1, 256], strides = [1, 1]} : vector<10x256xf32> to vector<1x256xf32>
    %184 = vector.broadcast %183 : vector<1x256xf32> to vector<8x256xf32>
    %185 = arith.mulf %182, %184 : vector<8x256xf32>
    %c241_i32 = arith.constant 241 : i32
    %186 = tpu.dynamic_rotate %163 by %c241_i32 dim 1 : vector<8x256xf32>, i32 -> vector<8x256xf32>
    %187 = vector.extract_strided_slice %164 {offsets = [6, 0], sizes = [1, 256], strides = [1, 1]} : vector<10x256xf32> to vector<1x256xf32>
    %188 = vector.broadcast %187 : vector<1x256xf32> to vector<8x256xf32>
    %189 = arith.mulf %186, %188 : vector<8x256xf32>
    %c240_i32 = arith.constant 240 : i32
    %190 = tpu.dynamic_rotate %163 by %c240_i32 dim 1 : vector<8x256xf32>, i32 -> vector<8x256xf32>
    %191 = vector.extract_strided_slice %164 {offsets = [7, 0], sizes = [1, 256], strides = [1, 1]} : vector<10x256xf32> to vector<1x256xf32>
    %192 = vector.broadcast %191 : vector<1x256xf32> to vector<8x256xf32>
    %193 = arith.mulf %190, %192 : vector<8x256xf32>
    %c239_i32 = arith.constant 239 : i32
    %194 = tpu.dynamic_rotate %163 by %c239_i32 dim 1 : vector<8x256xf32>, i32 -> vector<8x256xf32>
    %195 = vector.extract_strided_slice %164 {offsets = [8, 0], sizes = [1, 256], strides = [1, 1]} : vector<10x256xf32> to vector<1x256xf32>
    %196 = vector.broadcast %195 : vector<1x256xf32> to vector<8x256xf32>
    %197 = arith.mulf %194, %196 : vector<8x256xf32>
    %198 = tpu.concatenate %169, %173, %177, %181, %163, %185, %189, %193, %197 in 0 : vector<8x256xf32>, vector<8x256xf32>, vector<8x256xf32>, vector<8x256xf32>, vector<8x256xf32>, vector<8x256xf32>, vector<8x256xf32>, vector<8x256xf32>, vector<8x256xf32> -> vector<72x256xf32>
    %c2 = arith.constant 2 : index
    %c0_51 = arith.constant 0 : index
    %c0_52 = arith.constant 0 : index
    %199 = vector.load %arg7[%c2, %c0_51, %c0_52] : memref<6x8x72xf32, #tpu.memory_space<vmem>>, vector<1x8x72xf32>
    %200 = vector.shape_cast %199 : vector<1x8x72xf32> to vector<8x72xf32>
    %cst_53 = arith.constant dense<0.000000e+00> : vector<8x256xf32>
    %201 = tpu.matmul %200, %198, %cst_53 {dimension_numbers = #tpu.dot_dimension_numbers<[1], [0], [0], [1], [0, 0, 1, 1], [], []>} : vector<8x72xf32>, vector<72x256xf32>, vector<8x256xf32> -> vector<8x256xf32>
    %202 = arith.mulf %201, %201 : vector<8x256xf32>
    %203 = tpu.concatenate %201, %202 in 0 : vector<8x256xf32>, vector<8x256xf32> -> vector<16x256xf32>
    %204 = vector.broadcast %165 : vector<1x256xf32> to vector<16x256xf32>
    %205 = arith.mulf %203, %204 : vector<16x256xf32>
    %cst_54 = arith.constant dense<0.000000e+00> : vector<16xf32>
    %206 = vector.multi_reduction <add>, %205, %cst_54 [1] : vector<16x256xf32> to vector<16xf32>
    %207 = vector.shape_cast %206 : vector<16xf32> to vector<16x1xf32>
    %208 = vector.extract_strided_slice %207 {offsets = [0, 0], sizes = [4, 1], strides = [1, 1]} : vector<16x1xf32> to vector<4x1xf32>
    %209 = vector.extract_strided_slice %207 {offsets = [8, 0], sizes = [4, 1], strides = [1, 1]} : vector<16x1xf32> to vector<4x1xf32>
    %210 = vector.extract_strided_slice %207 {offsets = [4, 0], sizes = [4, 1], strides = [1, 1]} : vector<16x1xf32> to vector<4x1xf32>
    %211 = arith.addf %208, %210 : vector<4x1xf32>
    %212 = vector.extract_strided_slice %207 {offsets = [12, 0], sizes = [4, 1], strides = [1, 1]} : vector<16x1xf32> to vector<4x1xf32>
    %213 = arith.addf %209, %212 : vector<4x1xf32>
    %cst_55 = arith.constant 0.001953125 : f32
    %214 = vector.broadcast %cst_55 : f32 to vector<4x1xf32>
    %215 = arith.mulf %211, %214 : vector<4x1xf32>
    %cst_56 = arith.constant 0.001953125 : f32
    %216 = vector.broadcast %cst_56 : f32 to vector<4x1xf32>
    %217 = arith.mulf %213, %216 : vector<4x1xf32>
    %218 = arith.mulf %215, %215 : vector<4x1xf32>
    %219 = arith.subf %217, %218 : vector<4x1xf32>
    %c1_57 = arith.constant 1 : index
    %c0_58 = arith.constant 0 : index
    %c0_59 = arith.constant 0 : index
    %220 = vector.load %arg8[%c1_57, %c0_58, %c0_59] : memref<3x4x1xf32, #tpu.memory_space<vmem>>, vector<1x4x1xf32>
    %221 = vector.shape_cast %220 : vector<1x4x1xf32> to vector<4x1xf32>
    %cst_60 = arith.constant 9.99999974E-6 : f32
    %222 = vector.broadcast %cst_60 : f32 to vector<4x1xf32>
    %223 = arith.addf %219, %222 : vector<4x1xf32>
    %224 = math.rsqrt %223 : vector<4x1xf32>
    %225 = arith.mulf %221, %224 : vector<4x1xf32>
    %c1_61 = arith.constant 1 : index
    %c0_62 = arith.constant 0 : index
    %c0_63 = arith.constant 0 : index
    %226 = vector.load %arg9[%c1_61, %c0_62, %c0_63] : memref<3x4x1xf32, #tpu.memory_space<vmem>>, vector<1x4x1xf32>
    %227 = vector.shape_cast %226 : vector<1x4x1xf32> to vector<4x1xf32>
    %228 = arith.mulf %215, %225 : vector<4x1xf32>
    %229 = arith.subf %227, %228 : vector<4x1xf32>
    %230 = tpu.concatenate %225, %225 in 0 : vector<4x1xf32>, vector<4x1xf32> -> vector<8x1xf32>
    %231 = tpu.concatenate %229, %229 in 0 : vector<4x1xf32>, vector<4x1xf32> -> vector<8x1xf32>
    %232 = vector.broadcast %230 : vector<8x1xf32> to vector<8x256xf32>
    %233 = arith.mulf %201, %232 : vector<8x256xf32>
    %234 = vector.broadcast %231 : vector<8x1xf32> to vector<8x256xf32>
    %235 = arith.addf %233, %234 : vector<8x256xf32>
    %cst_64 = arith.constant 0.000000e+00 : f32
    %236 = vector.broadcast %cst_64 : f32 to vector<8x256xf32>
    %237 = arith.subf %236, %235 : vector<8x256xf32>
    %238 = math.exp %237 : vector<8x256xf32>
    %cst_65 = arith.constant 1.000000e+00 : f32
    %239 = vector.broadcast %cst_65 : f32 to vector<8x256xf32>
    %240 = arith.addf %239, %238 : vector<8x256xf32>
    %241 = tpu.reciprocal %240 {approx = true} : vector<8x256xf32> -> vector<8x256xf32>
    %242 = arith.mulf %235, %241 : vector<8x256xf32>
    %c17_i32_66 = arith.constant 17 : i32
    %243 = tpu.dynamic_rotate %242 by %c17_i32_66 dim 1 : vector<8x256xf32>, i32 -> vector<8x256xf32>
    %244 = vector.extract_strided_slice %164 {offsets = [0, 0], sizes = [1, 256], strides = [1, 1]} : vector<10x256xf32> to vector<1x256xf32>
    %245 = vector.broadcast %244 : vector<1x256xf32> to vector<8x256xf32>
    %246 = arith.mulf %243, %245 : vector<8x256xf32>
    %c16_i32_67 = arith.constant 16 : i32
    %247 = tpu.dynamic_rotate %242 by %c16_i32_67 dim 1 : vector<8x256xf32>, i32 -> vector<8x256xf32>
    %248 = vector.extract_strided_slice %164 {offsets = [1, 0], sizes = [1, 256], strides = [1, 1]} : vector<10x256xf32> to vector<1x256xf32>
    %249 = vector.broadcast %248 : vector<1x256xf32> to vector<8x256xf32>
    %250 = arith.mulf %247, %249 : vector<8x256xf32>
    %c15_i32_68 = arith.constant 15 : i32
    %251 = tpu.dynamic_rotate %242 by %c15_i32_68 dim 1 : vector<8x256xf32>, i32 -> vector<8x256xf32>
    %252 = vector.extract_strided_slice %164 {offsets = [2, 0], sizes = [1, 256], strides = [1, 1]} : vector<10x256xf32> to vector<1x256xf32>
    %253 = vector.broadcast %252 : vector<1x256xf32> to vector<8x256xf32>
    %254 = arith.mulf %251, %253 : vector<8x256xf32>
    %c1_i32_69 = arith.constant 1 : i32
    %255 = tpu.dynamic_rotate %242 by %c1_i32_69 dim 1 : vector<8x256xf32>, i32 -> vector<8x256xf32>
    %256 = vector.extract_strided_slice %164 {offsets = [3, 0], sizes = [1, 256], strides = [1, 1]} : vector<10x256xf32> to vector<1x256xf32>
    %257 = vector.broadcast %256 : vector<1x256xf32> to vector<8x256xf32>
    %258 = arith.mulf %255, %257 : vector<8x256xf32>
    %c255_i32_70 = arith.constant 255 : i32
    %259 = tpu.dynamic_rotate %242 by %c255_i32_70 dim 1 : vector<8x256xf32>, i32 -> vector<8x256xf32>
    %260 = vector.extract_strided_slice %164 {offsets = [5, 0], sizes = [1, 256], strides = [1, 1]} : vector<10x256xf32> to vector<1x256xf32>
    %261 = vector.broadcast %260 : vector<1x256xf32> to vector<8x256xf32>
    %262 = arith.mulf %259, %261 : vector<8x256xf32>
    %c241_i32_71 = arith.constant 241 : i32
    %263 = tpu.dynamic_rotate %242 by %c241_i32_71 dim 1 : vector<8x256xf32>, i32 -> vector<8x256xf32>
    %264 = vector.extract_strided_slice %164 {offsets = [6, 0], sizes = [1, 256], strides = [1, 1]} : vector<10x256xf32> to vector<1x256xf32>
    %265 = vector.broadcast %264 : vector<1x256xf32> to vector<8x256xf32>
    %266 = arith.mulf %263, %265 : vector<8x256xf32>
    %c240_i32_72 = arith.constant 240 : i32
    %267 = tpu.dynamic_rotate %242 by %c240_i32_72 dim 1 : vector<8x256xf32>, i32 -> vector<8x256xf32>
    %268 = vector.extract_strided_slice %164 {offsets = [7, 0], sizes = [1, 256], strides = [1, 1]} : vector<10x256xf32> to vector<1x256xf32>
    %269 = vector.broadcast %268 : vector<1x256xf32> to vector<8x256xf32>
    %270 = arith.mulf %267, %269 : vector<8x256xf32>
    %c239_i32_73 = arith.constant 239 : i32
    %271 = tpu.dynamic_rotate %242 by %c239_i32_73 dim 1 : vector<8x256xf32>, i32 -> vector<8x256xf32>
    %272 = vector.extract_strided_slice %164 {offsets = [8, 0], sizes = [1, 256], strides = [1, 1]} : vector<10x256xf32> to vector<1x256xf32>
    %273 = vector.broadcast %272 : vector<1x256xf32> to vector<8x256xf32>
    %274 = arith.mulf %271, %273 : vector<8x256xf32>
    %275 = tpu.concatenate %246, %250, %254, %258, %242, %262, %266, %270, %274 in 0 : vector<8x256xf32>, vector<8x256xf32>, vector<8x256xf32>, vector<8x256xf32>, vector<8x256xf32>, vector<8x256xf32>, vector<8x256xf32>, vector<8x256xf32>, vector<8x256xf32> -> vector<72x256xf32>
    %c3 = arith.constant 3 : index
    %c0_74 = arith.constant 0 : index
    %c0_75 = arith.constant 0 : index
    %276 = vector.load %arg7[%c3, %c0_74, %c0_75] : memref<6x8x72xf32, #tpu.memory_space<vmem>>, vector<1x8x72xf32>
    %277 = vector.shape_cast %276 : vector<1x8x72xf32> to vector<8x72xf32>
    %cst_76 = arith.constant dense<0.000000e+00> : vector<8x256xf32>
    %278 = tpu.matmul %277, %275, %cst_76 {dimension_numbers = #tpu.dot_dimension_numbers<[1], [0], [0], [1], [0, 0, 1, 1], [], []>} : vector<8x72xf32>, vector<72x256xf32>, vector<8x256xf32> -> vector<8x256xf32>
    %279 = arith.mulf %278, %278 : vector<8x256xf32>
    %280 = tpu.concatenate %278, %279 in 0 : vector<8x256xf32>, vector<8x256xf32> -> vector<16x256xf32>
    %281 = vector.broadcast %165 : vector<1x256xf32> to vector<16x256xf32>
    %282 = arith.mulf %280, %281 : vector<16x256xf32>
    %cst_77 = arith.constant dense<0.000000e+00> : vector<16xf32>
    %283 = vector.multi_reduction <add>, %282, %cst_77 [1] : vector<16x256xf32> to vector<16xf32>
    %284 = vector.shape_cast %283 : vector<16xf32> to vector<16x1xf32>
    %285 = vector.extract_strided_slice %284 {offsets = [0, 0], sizes = [4, 1], strides = [1, 1]} : vector<16x1xf32> to vector<4x1xf32>
    %286 = vector.extract_strided_slice %284 {offsets = [8, 0], sizes = [4, 1], strides = [1, 1]} : vector<16x1xf32> to vector<4x1xf32>
    %287 = vector.extract_strided_slice %284 {offsets = [4, 0], sizes = [4, 1], strides = [1, 1]} : vector<16x1xf32> to vector<4x1xf32>
    %288 = arith.addf %285, %287 : vector<4x1xf32>
    %289 = vector.extract_strided_slice %284 {offsets = [12, 0], sizes = [4, 1], strides = [1, 1]} : vector<16x1xf32> to vector<4x1xf32>
    %290 = arith.addf %286, %289 : vector<4x1xf32>
    %cst_78 = arith.constant 0.001953125 : f32
    %291 = vector.broadcast %cst_78 : f32 to vector<4x1xf32>
    %292 = arith.mulf %288, %291 : vector<4x1xf32>
    %cst_79 = arith.constant 0.001953125 : f32
    %293 = vector.broadcast %cst_79 : f32 to vector<4x1xf32>
    %294 = arith.mulf %290, %293 : vector<4x1xf32>
    %295 = arith.mulf %292, %292 : vector<4x1xf32>
    %296 = arith.subf %294, %295 : vector<4x1xf32>
    %c1_80 = arith.constant 1 : index
    %c0_81 = arith.constant 0 : index
    %c0_82 = arith.constant 0 : index
    %297 = vector.load %arg8[%c1_80, %c0_81, %c0_82] : memref<3x4x1xf32, #tpu.memory_space<vmem>>, vector<1x4x1xf32>
    %298 = vector.shape_cast %297 : vector<1x4x1xf32> to vector<4x1xf32>
    %cst_83 = arith.constant 9.99999974E-6 : f32
    %299 = vector.broadcast %cst_83 : f32 to vector<4x1xf32>
    %300 = arith.addf %296, %299 : vector<4x1xf32>
    %301 = math.rsqrt %300 : vector<4x1xf32>
    %302 = arith.mulf %298, %301 : vector<4x1xf32>
    %c1_84 = arith.constant 1 : index
    %c0_85 = arith.constant 0 : index
    %c0_86 = arith.constant 0 : index
    %303 = vector.load %arg9[%c1_84, %c0_85, %c0_86] : memref<3x4x1xf32, #tpu.memory_space<vmem>>, vector<1x4x1xf32>
    %304 = vector.shape_cast %303 : vector<1x4x1xf32> to vector<4x1xf32>
    %305 = arith.mulf %292, %302 : vector<4x1xf32>
    %306 = arith.subf %304, %305 : vector<4x1xf32>
    %307 = tpu.concatenate %302, %302 in 0 : vector<4x1xf32>, vector<4x1xf32> -> vector<8x1xf32>
    %308 = tpu.concatenate %306, %306 in 0 : vector<4x1xf32>, vector<4x1xf32> -> vector<8x1xf32>
    %309 = vector.broadcast %307 : vector<8x1xf32> to vector<8x256xf32>
    %310 = arith.mulf %278, %309 : vector<8x256xf32>
    %311 = vector.broadcast %308 : vector<8x1xf32> to vector<8x256xf32>
    %312 = arith.addf %310, %311 : vector<8x256xf32>
    %313 = arith.addf %312, %163 : vector<8x256xf32>
    %cst_87 = arith.constant 0.000000e+00 : f32
    %314 = vector.broadcast %cst_87 : f32 to vector<8x256xf32>
    %315 = arith.subf %314, %313 : vector<8x256xf32>
    %316 = math.exp %315 : vector<8x256xf32>
    %cst_88 = arith.constant 1.000000e+00 : f32
    %317 = vector.broadcast %cst_88 : f32 to vector<8x256xf32>
    %318 = arith.addf %317, %316 : vector<8x256xf32>
    %319 = tpu.reciprocal %318 {approx = true} : vector<8x256xf32> -> vector<8x256xf32>
    %320 = arith.mulf %313, %319 : vector<8x256xf32>
    %c0_89 = arith.constant 0 : index
    %c0_90 = arith.constant 0 : index
    %321 = vector.load %arg6[%c0_89, %c0_90] : memref<10x256xf32, #tpu.memory_space<vmem>>, vector<10x256xf32>
    %322 = vector.extract_strided_slice %321 {offsets = [9, 0], sizes = [1, 256], strides = [1, 1]} : vector<10x256xf32> to vector<1x256xf32>
    %c17_i32_91 = arith.constant 17 : i32
    %323 = tpu.dynamic_rotate %320 by %c17_i32_91 dim 1 : vector<8x256xf32>, i32 -> vector<8x256xf32>
    %324 = vector.extract_strided_slice %321 {offsets = [0, 0], sizes = [1, 256], strides = [1, 1]} : vector<10x256xf32> to vector<1x256xf32>
    %325 = vector.broadcast %324 : vector<1x256xf32> to vector<8x256xf32>
    %326 = arith.mulf %323, %325 : vector<8x256xf32>
    %c16_i32_92 = arith.constant 16 : i32
    %327 = tpu.dynamic_rotate %320 by %c16_i32_92 dim 1 : vector<8x256xf32>, i32 -> vector<8x256xf32>
    %328 = vector.extract_strided_slice %321 {offsets = [1, 0], sizes = [1, 256], strides = [1, 1]} : vector<10x256xf32> to vector<1x256xf32>
    %329 = vector.broadcast %328 : vector<1x256xf32> to vector<8x256xf32>
    %330 = arith.mulf %327, %329 : vector<8x256xf32>
    %c15_i32_93 = arith.constant 15 : i32
    %331 = tpu.dynamic_rotate %320 by %c15_i32_93 dim 1 : vector<8x256xf32>, i32 -> vector<8x256xf32>
    %332 = vector.extract_strided_slice %321 {offsets = [2, 0], sizes = [1, 256], strides = [1, 1]} : vector<10x256xf32> to vector<1x256xf32>
    %333 = vector.broadcast %332 : vector<1x256xf32> to vector<8x256xf32>
    %334 = arith.mulf %331, %333 : vector<8x256xf32>
    %c1_i32_94 = arith.constant 1 : i32
    %335 = tpu.dynamic_rotate %320 by %c1_i32_94 dim 1 : vector<8x256xf32>, i32 -> vector<8x256xf32>
    %336 = vector.extract_strided_slice %321 {offsets = [3, 0], sizes = [1, 256], strides = [1, 1]} : vector<10x256xf32> to vector<1x256xf32>
    %337 = vector.broadcast %336 : vector<1x256xf32> to vector<8x256xf32>
    %338 = arith.mulf %335, %337 : vector<8x256xf32>
    %c255_i32_95 = arith.constant 255 : i32
    %339 = tpu.dynamic_rotate %320 by %c255_i32_95 dim 1 : vector<8x256xf32>, i32 -> vector<8x256xf32>
    %340 = vector.extract_strided_slice %321 {offsets = [5, 0], sizes = [1, 256], strides = [1, 1]} : vector<10x256xf32> to vector<1x256xf32>
    %341 = vector.broadcast %340 : vector<1x256xf32> to vector<8x256xf32>
    %342 = arith.mulf %339, %341 : vector<8x256xf32>
    %c241_i32_96 = arith.constant 241 : i32
    %343 = tpu.dynamic_rotate %320 by %c241_i32_96 dim 1 : vector<8x256xf32>, i32 -> vector<8x256xf32>
    %344 = vector.extract_strided_slice %321 {offsets = [6, 0], sizes = [1, 256], strides = [1, 1]} : vector<10x256xf32> to vector<1x256xf32>
    %345 = vector.broadcast %344 : vector<1x256xf32> to vector<8x256xf32>
    %346 = arith.mulf %343, %345 : vector<8x256xf32>
    %c240_i32_97 = arith.constant 240 : i32
    %347 = tpu.dynamic_rotate %320 by %c240_i32_97 dim 1 : vector<8x256xf32>, i32 -> vector<8x256xf32>
    %348 = vector.extract_strided_slice %321 {offsets = [7, 0], sizes = [1, 256], strides = [1, 1]} : vector<10x256xf32> to vector<1x256xf32>
    %349 = vector.broadcast %348 : vector<1x256xf32> to vector<8x256xf32>
    %350 = arith.mulf %347, %349 : vector<8x256xf32>
    %c239_i32_98 = arith.constant 239 : i32
    %351 = tpu.dynamic_rotate %320 by %c239_i32_98 dim 1 : vector<8x256xf32>, i32 -> vector<8x256xf32>
    %352 = vector.extract_strided_slice %321 {offsets = [8, 0], sizes = [1, 256], strides = [1, 1]} : vector<10x256xf32> to vector<1x256xf32>
    %353 = vector.broadcast %352 : vector<1x256xf32> to vector<8x256xf32>
    %354 = arith.mulf %351, %353 : vector<8x256xf32>
    %355 = tpu.concatenate %326, %330, %334, %338, %320, %342, %346, %350, %354 in 0 : vector<8x256xf32>, vector<8x256xf32>, vector<8x256xf32>, vector<8x256xf32>, vector<8x256xf32>, vector<8x256xf32>, vector<8x256xf32>, vector<8x256xf32>, vector<8x256xf32> -> vector<72x256xf32>
    %c4 = arith.constant 4 : index
    %c0_99 = arith.constant 0 : index
    %c0_100 = arith.constant 0 : index
    %356 = vector.load %arg7[%c4, %c0_99, %c0_100] : memref<6x8x72xf32, #tpu.memory_space<vmem>>, vector<1x8x72xf32>
    %357 = vector.shape_cast %356 : vector<1x8x72xf32> to vector<8x72xf32>
    %cst_101 = arith.constant dense<0.000000e+00> : vector<8x256xf32>
    %358 = tpu.matmul %357, %355, %cst_101 {dimension_numbers = #tpu.dot_dimension_numbers<[1], [0], [0], [1], [0, 0, 1, 1], [], []>} : vector<8x72xf32>, vector<72x256xf32>, vector<8x256xf32> -> vector<8x256xf32>
    %359 = arith.mulf %358, %358 : vector<8x256xf32>
    %360 = tpu.concatenate %358, %359 in 0 : vector<8x256xf32>, vector<8x256xf32> -> vector<16x256xf32>
    %361 = vector.broadcast %322 : vector<1x256xf32> to vector<16x256xf32>
    %362 = arith.mulf %360, %361 : vector<16x256xf32>
    %cst_102 = arith.constant dense<0.000000e+00> : vector<16xf32>
    %363 = vector.multi_reduction <add>, %362, %cst_102 [1] : vector<16x256xf32> to vector<16xf32>
    %364 = vector.shape_cast %363 : vector<16xf32> to vector<16x1xf32>
    %365 = vector.extract_strided_slice %364 {offsets = [0, 0], sizes = [4, 1], strides = [1, 1]} : vector<16x1xf32> to vector<4x1xf32>
    %366 = vector.extract_strided_slice %364 {offsets = [8, 0], sizes = [4, 1], strides = [1, 1]} : vector<16x1xf32> to vector<4x1xf32>
    %367 = vector.extract_strided_slice %364 {offsets = [4, 0], sizes = [4, 1], strides = [1, 1]} : vector<16x1xf32> to vector<4x1xf32>
    %368 = arith.addf %365, %367 : vector<4x1xf32>
    %369 = vector.extract_strided_slice %364 {offsets = [12, 0], sizes = [4, 1], strides = [1, 1]} : vector<16x1xf32> to vector<4x1xf32>
    %370 = arith.addf %366, %369 : vector<4x1xf32>
    %cst_103 = arith.constant 0.001953125 : f32
    %371 = vector.broadcast %cst_103 : f32 to vector<4x1xf32>
    %372 = arith.mulf %368, %371 : vector<4x1xf32>
    %cst_104 = arith.constant 0.001953125 : f32
    %373 = vector.broadcast %cst_104 : f32 to vector<4x1xf32>
    %374 = arith.mulf %370, %373 : vector<4x1xf32>
    %375 = arith.mulf %372, %372 : vector<4x1xf32>
    %376 = arith.subf %374, %375 : vector<4x1xf32>
    %c2_105 = arith.constant 2 : index
    %c0_106 = arith.constant 0 : index
    %c0_107 = arith.constant 0 : index
    %377 = vector.load %arg8[%c2_105, %c0_106, %c0_107] : memref<3x4x1xf32, #tpu.memory_space<vmem>>, vector<1x4x1xf32>
    %378 = vector.shape_cast %377 : vector<1x4x1xf32> to vector<4x1xf32>
    %cst_108 = arith.constant 9.99999974E-6 : f32
    %379 = vector.broadcast %cst_108 : f32 to vector<4x1xf32>
    %380 = arith.addf %376, %379 : vector<4x1xf32>
    %381 = math.rsqrt %380 : vector<4x1xf32>
    %382 = arith.mulf %378, %381 : vector<4x1xf32>
    %c2_109 = arith.constant 2 : index
    %c0_110 = arith.constant 0 : index
    %c0_111 = arith.constant 0 : index
    %383 = vector.load %arg9[%c2_109, %c0_110, %c0_111] : memref<3x4x1xf32, #tpu.memory_space<vmem>>, vector<1x4x1xf32>
    %384 = vector.shape_cast %383 : vector<1x4x1xf32> to vector<4x1xf32>
    %385 = arith.mulf %372, %382 : vector<4x1xf32>
    %386 = arith.subf %384, %385 : vector<4x1xf32>
    %387 = tpu.concatenate %382, %382 in 0 : vector<4x1xf32>, vector<4x1xf32> -> vector<8x1xf32>
    %388 = tpu.concatenate %386, %386 in 0 : vector<4x1xf32>, vector<4x1xf32> -> vector<8x1xf32>
    %389 = vector.broadcast %387 : vector<8x1xf32> to vector<8x256xf32>
    %390 = arith.mulf %358, %389 : vector<8x256xf32>
    %391 = vector.broadcast %388 : vector<8x1xf32> to vector<8x256xf32>
    %392 = arith.addf %390, %391 : vector<8x256xf32>
    %cst_112 = arith.constant 0.000000e+00 : f32
    %393 = vector.broadcast %cst_112 : f32 to vector<8x256xf32>
    %394 = arith.subf %393, %392 : vector<8x256xf32>
    %395 = math.exp %394 : vector<8x256xf32>
    %cst_113 = arith.constant 1.000000e+00 : f32
    %396 = vector.broadcast %cst_113 : f32 to vector<8x256xf32>
    %397 = arith.addf %396, %395 : vector<8x256xf32>
    %398 = tpu.reciprocal %397 {approx = true} : vector<8x256xf32> -> vector<8x256xf32>
    %399 = arith.mulf %392, %398 : vector<8x256xf32>
    %c17_i32_114 = arith.constant 17 : i32
    %400 = tpu.dynamic_rotate %399 by %c17_i32_114 dim 1 : vector<8x256xf32>, i32 -> vector<8x256xf32>
    %401 = vector.extract_strided_slice %321 {offsets = [0, 0], sizes = [1, 256], strides = [1, 1]} : vector<10x256xf32> to vector<1x256xf32>
    %402 = vector.broadcast %401 : vector<1x256xf32> to vector<8x256xf32>
    %403 = arith.mulf %400, %402 : vector<8x256xf32>
    %c16_i32_115 = arith.constant 16 : i32
    %404 = tpu.dynamic_rotate %399 by %c16_i32_115 dim 1 : vector<8x256xf32>, i32 -> vector<8x256xf32>
    %405 = vector.extract_strided_slice %321 {offsets = [1, 0], sizes = [1, 256], strides = [1, 1]} : vector<10x256xf32> to vector<1x256xf32>
    %406 = vector.broadcast %405 : vector<1x256xf32> to vector<8x256xf32>
    %407 = arith.mulf %404, %406 : vector<8x256xf32>
    %c15_i32_116 = arith.constant 15 : i32
    %408 = tpu.dynamic_rotate %399 by %c15_i32_116 dim 1 : vector<8x256xf32>, i32 -> vector<8x256xf32>
    %409 = vector.extract_strided_slice %321 {offsets = [2, 0], sizes = [1, 256], strides = [1, 1]} : vector<10x256xf32> to vector<1x256xf32>
    %410 = vector.broadcast %409 : vector<1x256xf32> to vector<8x256xf32>
    %411 = arith.mulf %408, %410 : vector<8x256xf32>
    %c1_i32_117 = arith.constant 1 : i32
    %412 = tpu.dynamic_rotate %399 by %c1_i32_117 dim 1 : vector<8x256xf32>, i32 -> vector<8x256xf32>
    %413 = vector.extract_strided_slice %321 {offsets = [3, 0], sizes = [1, 256], strides = [1, 1]} : vector<10x256xf32> to vector<1x256xf32>
    %414 = vector.broadcast %413 : vector<1x256xf32> to vector<8x256xf32>
    %415 = arith.mulf %412, %414 : vector<8x256xf32>
    %c255_i32_118 = arith.constant 255 : i32
    %416 = tpu.dynamic_rotate %399 by %c255_i32_118 dim 1 : vector<8x256xf32>, i32 -> vector<8x256xf32>
    %417 = vector.extract_strided_slice %321 {offsets = [5, 0], sizes = [1, 256], strides = [1, 1]} : vector<10x256xf32> to vector<1x256xf32>
    %418 = vector.broadcast %417 : vector<1x256xf32> to vector<8x256xf32>
    %419 = arith.mulf %416, %418 : vector<8x256xf32>
    %c241_i32_119 = arith.constant 241 : i32
    %420 = tpu.dynamic_rotate %399 by %c241_i32_119 dim 1 : vector<8x256xf32>, i32 -> vector<8x256xf32>
    %421 = vector.extract_strided_slice %321 {offsets = [6, 0], sizes = [1, 256], strides = [1, 1]} : vector<10x256xf32> to vector<1x256xf32>
    %422 = vector.broadcast %421 : vector<1x256xf32> to vector<8x256xf32>
    %423 = arith.mulf %420, %422 : vector<8x256xf32>
    %c240_i32_120 = arith.constant 240 : i32
    %424 = tpu.dynamic_rotate %399 by %c240_i32_120 dim 1 : vector<8x256xf32>, i32 -> vector<8x256xf32>
    %425 = vector.extract_strided_slice %321 {offsets = [7, 0], sizes = [1, 256], strides = [1, 1]} : vector<10x256xf32> to vector<1x256xf32>
    %426 = vector.broadcast %425 : vector<1x256xf32> to vector<8x256xf32>
    %427 = arith.mulf %424, %426 : vector<8x256xf32>
    %c239_i32_121 = arith.constant 239 : i32
    %428 = tpu.dynamic_rotate %399 by %c239_i32_121 dim 1 : vector<8x256xf32>, i32 -> vector<8x256xf32>
    %429 = vector.extract_strided_slice %321 {offsets = [8, 0], sizes = [1, 256], strides = [1, 1]} : vector<10x256xf32> to vector<1x256xf32>
    %430 = vector.broadcast %429 : vector<1x256xf32> to vector<8x256xf32>
    %431 = arith.mulf %428, %430 : vector<8x256xf32>
    %432 = tpu.concatenate %403, %407, %411, %415, %399, %419, %423, %427, %431 in 0 : vector<8x256xf32>, vector<8x256xf32>, vector<8x256xf32>, vector<8x256xf32>, vector<8x256xf32>, vector<8x256xf32>, vector<8x256xf32>, vector<8x256xf32>, vector<8x256xf32> -> vector<72x256xf32>
    %c5 = arith.constant 5 : index
    %c0_122 = arith.constant 0 : index
    %c0_123 = arith.constant 0 : index
    %433 = vector.load %arg7[%c5, %c0_122, %c0_123] : memref<6x8x72xf32, #tpu.memory_space<vmem>>, vector<1x8x72xf32>
    %434 = vector.shape_cast %433 : vector<1x8x72xf32> to vector<8x72xf32>
    %cst_124 = arith.constant dense<0.000000e+00> : vector<8x256xf32>
    %435 = tpu.matmul %434, %432, %cst_124 {dimension_numbers = #tpu.dot_dimension_numbers<[1], [0], [0], [1], [0, 0, 1, 1], [], []>} : vector<8x72xf32>, vector<72x256xf32>, vector<8x256xf32> -> vector<8x256xf32>
    %436 = arith.mulf %435, %435 : vector<8x256xf32>
    %437 = tpu.concatenate %435, %436 in 0 : vector<8x256xf32>, vector<8x256xf32> -> vector<16x256xf32>
    %438 = vector.broadcast %322 : vector<1x256xf32> to vector<16x256xf32>
    %439 = arith.mulf %437, %438 : vector<16x256xf32>
    %cst_125 = arith.constant dense<0.000000e+00> : vector<16xf32>
    %440 = vector.multi_reduction <add>, %439, %cst_125 [1] : vector<16x256xf32> to vector<16xf32>
    %441 = vector.shape_cast %440 : vector<16xf32> to vector<16x1xf32>
    %442 = vector.extract_strided_slice %441 {offsets = [0, 0], sizes = [4, 1], strides = [1, 1]} : vector<16x1xf32> to vector<4x1xf32>
    %443 = vector.extract_strided_slice %441 {offsets = [8, 0], sizes = [4, 1], strides = [1, 1]} : vector<16x1xf32> to vector<4x1xf32>
    %444 = vector.extract_strided_slice %441 {offsets = [4, 0], sizes = [4, 1], strides = [1, 1]} : vector<16x1xf32> to vector<4x1xf32>
    %445 = arith.addf %442, %444 : vector<4x1xf32>
    %446 = vector.extract_strided_slice %441 {offsets = [12, 0], sizes = [4, 1], strides = [1, 1]} : vector<16x1xf32> to vector<4x1xf32>
    %447 = arith.addf %443, %446 : vector<4x1xf32>
    %cst_126 = arith.constant 0.001953125 : f32
    %448 = vector.broadcast %cst_126 : f32 to vector<4x1xf32>
    %449 = arith.mulf %445, %448 : vector<4x1xf32>
    %cst_127 = arith.constant 0.001953125 : f32
    %450 = vector.broadcast %cst_127 : f32 to vector<4x1xf32>
    %451 = arith.mulf %447, %450 : vector<4x1xf32>
    %452 = arith.mulf %449, %449 : vector<4x1xf32>
    %453 = arith.subf %451, %452 : vector<4x1xf32>
    %c2_128 = arith.constant 2 : index
    %c0_129 = arith.constant 0 : index
    %c0_130 = arith.constant 0 : index
    %454 = vector.load %arg8[%c2_128, %c0_129, %c0_130] : memref<3x4x1xf32, #tpu.memory_space<vmem>>, vector<1x4x1xf32>
    %455 = vector.shape_cast %454 : vector<1x4x1xf32> to vector<4x1xf32>
    %cst_131 = arith.constant 9.99999974E-6 : f32
    %456 = vector.broadcast %cst_131 : f32 to vector<4x1xf32>
    %457 = arith.addf %453, %456 : vector<4x1xf32>
    %458 = math.rsqrt %457 : vector<4x1xf32>
    %459 = arith.mulf %455, %458 : vector<4x1xf32>
    %c2_132 = arith.constant 2 : index
    %c0_133 = arith.constant 0 : index
    %c0_134 = arith.constant 0 : index
    %460 = vector.load %arg9[%c2_132, %c0_133, %c0_134] : memref<3x4x1xf32, #tpu.memory_space<vmem>>, vector<1x4x1xf32>
    %461 = vector.shape_cast %460 : vector<1x4x1xf32> to vector<4x1xf32>
    %462 = arith.mulf %449, %459 : vector<4x1xf32>
    %463 = arith.subf %461, %462 : vector<4x1xf32>
    %464 = tpu.concatenate %459, %459 in 0 : vector<4x1xf32>, vector<4x1xf32> -> vector<8x1xf32>
    %465 = tpu.concatenate %463, %463 in 0 : vector<4x1xf32>, vector<4x1xf32> -> vector<8x1xf32>
    %466 = vector.broadcast %464 : vector<8x1xf32> to vector<8x256xf32>
    %467 = arith.mulf %435, %466 : vector<8x256xf32>
    %468 = vector.broadcast %465 : vector<8x1xf32> to vector<8x256xf32>
    %469 = arith.addf %467, %468 : vector<8x256xf32>
    %470 = arith.addf %469, %320 : vector<8x256xf32>
    %cst_135 = arith.constant 0.000000e+00 : f32
    %471 = vector.broadcast %cst_135 : f32 to vector<8x256xf32>
    %472 = arith.subf %471, %470 : vector<8x256xf32>
    %473 = math.exp %472 : vector<8x256xf32>
    %cst_136 = arith.constant 1.000000e+00 : f32
    %474 = vector.broadcast %cst_136 : f32 to vector<8x256xf32>
    %475 = arith.addf %474, %473 : vector<8x256xf32>
    %476 = tpu.reciprocal %475 {approx = true} : vector<8x256xf32> -> vector<8x256xf32>
    %477 = arith.mulf %470, %476 : vector<8x256xf32>
    %c0_137 = arith.constant 0 : index
    %c0_138 = arith.constant 0 : index
    %478 = vector.load %arg10[%c0_137, %c0_138] : memref<6x8xf32, #tpu.memory_space<vmem>>, vector<6x8xf32>
    %cst_139 = arith.constant dense<0.000000e+00> : vector<6x256xf32>
    %479 = tpu.matmul %478, %477, %cst_139 {dimension_numbers = #tpu.dot_dimension_numbers<[1], [0], [0], [1], [0, 0, 1, 1], [], []>} : vector<6x8xf32>, vector<8x256xf32>, vector<6x256xf32> -> vector<6x256xf32>
    %c0_140 = arith.constant 0 : index
    %c0_141 = arith.constant 0 : index
    %480 = vector.load %arg11[%c0_140, %c0_141] : memref<6x1xf32, #tpu.memory_space<vmem>>, vector<6x1xf32>
    %481 = vector.broadcast %480 : vector<6x1xf32> to vector<6x256xf32>
    %482 = arith.addf %479, %481 : vector<6x256xf32>
    %c0_142 = arith.constant 0 : index
    %c0_143 = arith.constant 0 : index
    %483 = vector.load %arg12[%c0_142, %c0_143] : memref<6x256xf32, #tpu.memory_space<vmem>>, vector<6x256xf32>
    tpu.vector_store %arg12[%c0_142, %c0_143], %482 {strides = array<i32>} : memref<6x256xf32, #tpu.memory_space<vmem>>, vector<6x256xf32>,
    return
  }
  func.func @transform_0(%arg0: i32) -> (i32, i32) {
    %c0_i32 = arith.constant 0 : i32
    %c0_i32_0 = arith.constant 0 : i32
    %c0_i32_1 = arith.constant 0 : i32
    return %c0_i32, %c0_i32_0 : i32, i32
  }
  func.func @transform_1(%arg0: i32) -> (i32, i32) {
    %c0_i32 = arith.constant 0 : i32
    %c0_i32_0 = arith.constant 0 : i32
    %c0_i32_1 = arith.constant 0 : i32
    return %c0_i32, %c0_i32_0 : i32, i32
  }
  func.func @transform_2(%arg0: i32) -> (i32, i32) {
    %c0_i32 = arith.constant 0 : i32
    %c0_i32_0 = arith.constant 0 : i32
    %c0_i32_1 = arith.constant 0 : i32
    return %c0_i32, %c0_i32_0 : i32, i32
  }
  func.func @transform_3(%arg0: i32) -> (i32, i32) {
    %c0_i32 = arith.constant 0 : i32
    %c0_i32_0 = arith.constant 0 : i32
    %c0_i32_1 = arith.constant 0 : i32
    return %c0_i32, %c0_i32_0 : i32, i32
  }
  func.func @transform_4(%arg0: i32) -> (i32, i32) {
    %c0_i32 = arith.constant 0 : i32
    %c0_i32_0 = arith.constant 0 : i32
    %c0_i32_1 = arith.constant 0 : i32
    return %c0_i32, %c0_i32_0 : i32, i32
  }
  func.func @transform_5(%arg0: i32) -> (i32, i32) {
    %c0_i32 = arith.constant 0 : i32
    %c0_i32_0 = arith.constant 0 : i32
    %c0_i32_1 = arith.constant 0 : i32
    return %c0_i32, %c0_i32_0 : i32, i32
  }
  func.func @transform_6(%arg0: i32) -> (i32, i32, i32) {
    %c0_i32 = arith.constant 0 : i32
    %c0_i32_0 = arith.constant 0 : i32
    %c0_i32_1 = arith.constant 0 : i32
    %c0_i32_2 = arith.constant 0 : i32
    return %c0_i32, %c0_i32_0, %c0_i32_1 : i32, i32, i32
  }
  func.func @transform_7(%arg0: i32) -> (i32, i32, i32) {
    %c0_i32 = arith.constant 0 : i32
    %c0_i32_0 = arith.constant 0 : i32
    %c0_i32_1 = arith.constant 0 : i32
    %c0_i32_2 = arith.constant 0 : i32
    return %c0_i32, %c0_i32_0, %c0_i32_1 : i32, i32, i32
  }
  func.func @transform_8(%arg0: i32) -> (i32, i32, i32) {
    %c0_i32 = arith.constant 0 : i32
    %c0_i32_0 = arith.constant 0 : i32
    %c0_i32_1 = arith.constant 0 : i32
    %c0_i32_2 = arith.constant 0 : i32
    return %c0_i32, %c0_i32_0, %c0_i32_1 : i32, i32, i32
  }
  func.func @transform_9(%arg0: i32) -> (i32, i32) {
    %c0_i32 = arith.constant 0 : i32
    %c0_i32_0 = arith.constant 0 : i32
    %c0_i32_1 = arith.constant 0 : i32
    return %c0_i32, %c0_i32_0 : i32, i32
  }
  func.func @transform_10(%arg0: i32) -> (i32, i32) {
    %c0_i32 = arith.constant 0 : i32
    %c0_i32_0 = arith.constant 0 : i32
    %c0_i32_1 = arith.constant 0 : i32
    return %c0_i32, %c0_i32_0 : i32, i32
  }
  func.func @transform_11(%arg0: i32) -> (i32, i32) {
    %c0_i32 = arith.constant 0 : i32
    %c0_i32_0 = arith.constant 0 : i32
    %c0_i32_1 = arith.constant 0 : i32
    return %c0_i32, %c0_i32_0 : i32, i32
  }
}

</mosaic_0001>

<llo_original>
// kernel: tile.8
$region0: #{tile.8}
  #allocation0 [shape = 's32[1]{0}', space=sflag, size = 0x4, scoped, tag = 'scoped memory for tile.8']
  %s0 = inlined_call_operand.vmem [shape: f32[3], index: 0, kind: input, shape index: {}]
  %s1 = inlined_call_operand.vmem [shape: f32[2,3], index: 1, kind: output, shape index: {}]
  // Predicated region
  $region2: #{tile.8} parent=0 // pred_check
    _
  $region3: #{tile.8} parent=0 // pred_check_branch
    %3 = sbr.rel (0) target = $region5
  $region4: #{tile.8} parent=0 // pred_region
    _
  $region5: #{tile.8} parent=0 // pred_fallthru
    _
  %v4 = vld [vmem:[%s0] ss:$0 sm:$0xff]
  %5 = vst [vmem:[%s1] sm:$0x3] %v4

// kernel: tile.0
$region0: #{tile.0}
  %s0 = inlined_call_operand.vmem [shape: f32[2,3], index: 0, kind: input, shape index: {}]
  %s1 = inlined_call_operand.vmem [shape: f32[6,1], index: 1, kind: output, shape index: {}]
  $region1: #{tile.0} parent=0
    #allocation0 [shape = 'u8[4096]{0}', space=vmem, size = 0x1000, scoped, tag = 'scoped mem for input reshape']
    %s3 = sshllo.u32 0, 2
    %v4 = vld [vmem:[%s0] sm:%s3]
    %5 = vst [vmem:[#allocation0] sm:%s3] %v4
    %v6 = vld [vmem:[#allocation0] sm:$0x3]
    %vm7 = vcmask 7168
    %8 = vst.msk [vmem:[%s1] ss:$3 sm:$0x3] %vm7, %v6
    %v9 = vld [vmem:[#allocation0] sm:$0x3]
    %10 = vrot.lane.b32.xlu0 %v9, 127
    %v11 = vpop.permute.xlu0 %10
    %vm12 = vcmask 7168
    %s13 = scalar_lea.vmem %s1, 1
    %14 = vst.msk [vmem:[%s13] ss:$3 sm:$0x3] %vm12, %v11
    %v15 = vld [vmem:[#allocation0] sm:$0x3]
    %16 = vrot.lane.b32.xlu0 %v15, 126
    %v17 = vpop.permute.xlu0 %16
    %vm18 = vcmask 7168
    %s19 = scalar_lea.vmem %s1, 2
    %20 = vst.msk [vmem:[%s19] ss:$3 sm:$0x3] %vm18, %v17

// kernel: _lambda_.1
$region0: #{_lambda_.1}
  #allocation0 [shape = 'u32[]', space=smem, size = 0x4, offset = 0x4, fixed_abs, tag = 'smem constant byte address 0x4 - core index']
  #allocation1 [shape = 'u32[144,128]{1,0:T(1,128)}', space=vmem, size = 0x12000, scoped, tag = 'internal scratch']
  %s0 = inlined_call_operand.vmem [shape: f32[8,128], index: 0, kind: input, shape index: {}]
  %s1 = inlined_call_operand.vmem [shape: bf16[128,256], index: 1, kind: input, shape index: {}]
  %s2 = inlined_call_operand.vmem [shape: bf16[256,256], index: 2, kind: input, shape index: {}]
  %s3 = inlined_call_operand.vmem [shape: f32[10,256], index: 3, kind: input, shape index: {}]
  %s4 = inlined_call_operand.vmem [shape: f32[10,256], index: 4, kind: input, shape index: {}, may-alias: {4,5}]
  %s5 = inlined_call_operand.vmem [shape: f32[10,256], index: 5, kind: input, shape index: {}, may-alias: {4,5}]
  %s6 = inlined_call_operand.vmem [shape: f32[6,8,72], index: 6, kind: input, shape index: {}]
  %s7 = inlined_call_operand.vmem [shape: f32[3,4,1], index: 7, kind: input, shape index: {}]
  %s8 = inlined_call_operand.vmem [shape: f32[3,4,1], index: 8, kind: input, shape index: {}]
  %s9 = inlined_call_operand.vmem [shape: f32[6,8], index: 9, kind: input, shape index: {}]
  %s10 = inlined_call_operand.vmem [shape: f32[6,1], index: 10, kind: input, shape index: {}]
  %s11 = inlined_call_operand.vmem [shape: f32[6,256], index: 11, kind: output, shape index: {}]
  %s12 = sld [smem:[#allocation0]]
  $region54: #{_lambda_.1} parent=0
    _
  %s14 = ssub.s32 1, %s12
  %s15 = scalar_select 0, %s14, %s12
  // Predicated region
  $region2: #{_lambda_.1} parent=0 // pred_check
    _
  $region3: #{_lambda_.1} parent=0 // pred_check_branch
    %17 = sbr.rel (0) target = $region5
  $region4: #{_lambda_.1} parent=0 // pred_region
    _
  $region5: #{_lambda_.1} parent=0 // pred_fallthru
    _
  // Predicated region
  $region6: #{_lambda_.1} parent=0 // pred_check
    _
  $region7: #{_lambda_.1} parent=0 // pred_check_branch
    %19 = sbr.rel (0) target = $region9
  $region8: #{_lambda_.1} parent=0 // pred_region
    _
  $region9: #{_lambda_.1} parent=0 // pred_fallthru
    _
  // Predicated region
  $region10: #{_lambda_.1} parent=0 // pred_check
    _
  $region11: #{_lambda_.1} parent=0 // pred_check_branch
    %21 = sbr.rel (0) target = $region13
  $region12: #{_lambda_.1} parent=0 // pred_region
    _
  $region13: #{_lambda_.1} parent=0 // pred_fallthru
    _
  // Predicated region
  $region14: #{_lambda_.1} parent=0 // pred_check
    _
  $region15: #{_lambda_.1} parent=0 // pred_check_branch
    %23 = sbr.rel (0) target = $region17
  $region16: #{_lambda_.1} parent=0 // pred_region
    _
  $region17: #{_lambda_.1} parent=0 // pred_fallthru
    _
  // Predicated region
  $region18: #{_lambda_.1} parent=0 // pred_check
    _
  $region19: #{_lambda_.1} parent=0 // pred_check_branch
    %25 = sbr.rel (0) target = $region21
  $region20: #{_lambda_.1} parent=0 // pred_region
    _
  $region21: #{_lambda_.1} parent=0 // pred_fallthru
    _
  // Predicated region
  $region22: #{_lambda_.1} parent=0 // pred_check
    _
  $region23: #{_lambda_.1} parent=0 // pred_check_branch
    %27 = sbr.rel (0) target = $region25
  $region24: #{_lambda_.1} parent=0 // pred_region
    _
  $region25: #{_lambda_.1} parent=0 // pred_fallthru
    _
  // Predicated region
  $region26: #{_lambda_.1} parent=0 // pred_check
    _
  $region27: #{_lambda_.1} parent=0 // pred_check_branch
    %29 = sbr.rel (0) target = $region29
  $region28: #{_lambda_.1} parent=0 // pred_region
    _
  $region29: #{_lambda_.1} parent=0 // pred_fallthru
    _
  // Predicated region
  $region30: #{_lambda_.1} parent=0 // pred_check
    _
  $region31: #{_lambda_.1} parent=0 // pred_check_branch
    %31 = sbr.rel (0) target = $region33
  $region32: #{_lambda_.1} parent=0 // pred_region
    _
  $region33: #{_lambda_.1} parent=0 // pred_fallthru
    _
  // Predicated region
  $region34: #{_lambda_.1} parent=0 // pred_check
    _
  $region35: #{_lambda_.1} parent=0 // pred_check_branch
    %33 = sbr.rel (0) target = $region37
  $region36: #{_lambda_.1} parent=0 // pred_region
    _
  $region37: #{_lambda_.1} parent=0 // pred_fallthru
    _
  // Predicated region
  $region38: #{_lambda_.1} parent=0 // pred_check
    _
  $region39: #{_lambda_.1} parent=0 // pred_check_branch
    %35 = sbr.rel (0) target = $region41
  $region40: #{_lambda_.1} parent=0 // pred_region
    _
  $region41: #{_lambda_.1} parent=0 // pred_fallthru
    _
  // Predicated region
  $region42: #{_lambda_.1} parent=0 // pred_check
    _
  $region43: #{_lambda_.1} parent=0 // pred_check_branch
    %37 = sbr.rel (0) target = $region45
  $region44: #{_lambda_.1} parent=0 // pred_region
    _
  $region45: #{_lambda_.1} parent=0 // pred_fallthru
    _
  %v39 = vld [vmem:[%s0] sm:$0xff]
  %v40 = vpack.c.bf16 %v39, %v39
  %v41 = vld [vmem:[%s1] sm:$0xff]
  %v42 = vld [vmem:[%s1 + $0x8] sm:$0xff]
  %v43 = vld [vmem:[%s1 + $0x10] sm:$0xff]
  %v44 = vld [vmem:[%s1 + $0x18] sm:$0xff]
  %v45 = vld [vmem:[%s1 + $0x20] sm:$0xff]
  %v46 = vld [vmem:[%s1 + $0x28] sm:$0xff]
  %v47 = vld [vmem:[%s1 + $0x30] sm:$0xff]
  %v48 = vld [vmem:[%s1 + $0x38] sm:$0xff]
  %v49 = vld [vmem:[%s1 + $0x40] sm:$0xff]
  %v50 = vld [vmem:[%s1 + $0x48] sm:$0xff]
  %v51 = vld [vmem:[%s1 + $0x50] sm:$0xff]
  %v52 = vld [vmem:[%s1 + $0x58] sm:$0xff]
  %v53 = vld [vmem:[%s1 + $0x60] sm:$0xff]
  %v54 = vld [vmem:[%s1 + $0x68] sm:$0xff]
  %v55 = vld [vmem:[%s1 + $0x70] sm:$0xff]
  %v56 = vld [vmem:[%s1 + $0x78] sm:$0xff]
  %v73 = vunpack.c.l.b16 %v41
  %v74 = vunpack.c.h.b16 %v41
  %v75 = vunpack.c.l.b16 %v42
  %v76 = vunpack.c.h.b16 %v42
  %v77 = vunpack.c.l.b16 %v43
  %v78 = vunpack.c.h.b16 %v43
  %v79 = vunpack.c.l.b16 %v44
  %v80 = vunpack.c.h.b16 %v44
  %v81 = vunpack.c.l.b16 %v45
  %v82 = vunpack.c.h.b16 %v45
  %v83 = vunpack.c.l.b16 %v46
  %v84 = vunpack.c.h.b16 %v46
  %v85 = vunpack.c.l.b16 %v47
  %v86 = vunpack.c.h.b16 %v47
  %v87 = vunpack.c.l.b16 %v48
  %v88 = vunpack.c.h.b16 %v48
  %v89 = vunpack.c.l.b16 %v49
  %v90 = vunpack.c.h.b16 %v49
  %v91 = vunpack.c.l.b16 %v50
  %v92 = vunpack.c.h.b16 %v50
  %v93 = vunpack.c.l.b16 %v51
  %v94 = vunpack.c.h.b16 %v51
  %v95 = vunpack.c.l.b16 %v52
  %v96 = vunpack.c.h.b16 %v52
  %v97 = vunpack.c.l.b16 %v53
  %v98 = vunpack.c.h.b16 %v53
  %v99 = vunpack.c.l.b16 %v54
  %v100 = vunpack.c.h.b16 %v54
  %v101 = vunpack.c.l.b16 %v55
  %v102 = vunpack.c.h.b16 %v55
  %v103 = vunpack.c.l.b16 %v56
  %v104 = vunpack.c.h.b16 %v56
  %v105 = vpack.c.b16 %v75, %v73
  %v106 = vpack.c.b16 %v76, %v74
  %v107 = vpack.c.b16 %v79, %v77
  %v108 = vpack.c.b16 %v80, %v78
  %v109 = vpack.c.b16 %v83, %v81
  %v110 = vpack.c.b16 %v84, %v82
  %v111 = vpack.c.b16 %v87, %v85
  %v112 = vpack.c.b16 %v88, %v86
  %v113 = vpack.c.b16 %v91, %v89
  %v114 = vpack.c.b16 %v92, %v90
  %v115 = vpack.c.b16 %v95, %v93
  %v116 = vpack.c.b16 %v96, %v94
  %v117 = vpack.c.b16 %v99, %v97
  %v118 = vpack.c.b16 %v100, %v98
  %v119 = vpack.c.b16 %v103, %v101
  %v120 = vpack.c.b16 %v104, %v102
  %137 = vmatprep.subr.bf16.mxu0 %v106
  %138 = vmatpush1.bf16.msra.mxu0 %v105
  %139 = vmatprep.subr.bf16.mxu0 %v108
  %140 = vmatpush1.bf16.msra.mxu0 %v107
  %141 = vmatprep.subr.bf16.mxu0 %v110
  %142 = vmatpush1.bf16.msra.mxu0 %v109
  %143 = vmatprep.subr.bf16.mxu0 %v112
  %144 = vmatpush1.bf16.msra.mxu0 %v111
  %145 = vmatprep.subr.bf16.mxu0 %v114
  %146 = vmatpush1.bf16.msra.mxu0 %v113
  %147 = vmatprep.subr.bf16.mxu0 %v116
  %148 = vmatpush1.bf16.msra.mxu0 %v115
  %149 = vmatprep.subr.bf16.mxu0 %v118
  %150 = vmatpush1.bf16.msra.mxu0 %v117
  %151 = vmatprep.subr.bf16.mxu0 %v120
  %152 = vmatpush1.bf16.msra.mxu0 %v119
  %153 = vmatprep.subr.bf16.mxu0 0
  %154 = vmatpush1.bf16.msra.mxu0 0
  %155 = vmatprep.subr.bf16.mxu0 0
  %156 = vmatpush1.bf16.msra.mxu0 0
  %157 = vmatprep.subr.bf16.mxu0 0
  %158 = vmatpush1.bf16.msra.mxu0 0
  %159 = vmatprep.subr.bf16.mxu0 0
  %160 = vmatpush1.bf16.msra.mxu0 0
  %161 = vmatprep.subr.bf16.mxu0 0
  %162 = vmatpush1.bf16.msra.mxu0 0
  %163 = vmatprep.subr.bf16.mxu0 0
  %164 = vmatpush1.bf16.msra.mxu0 0
  %165 = vmatprep.subr.bf16.mxu0 0
  %166 = vmatpush1.bf16.msra.mxu0 0
  %167 = vmatprep.subr.bf16.mxu0 0
  %168 = vmatpush1.bf16.msra.mxu0 0
  %169 = vmatprep.mubr.bf16.mxu0 0
  %170 = vmatmul.mubr.bf16.gmra.mrb[0].mxu0 %v40
  %v171 = vpop.f32.mrb[0].mxu0
  %v172 = vadd.f32 0.0, %v171
  %v173 = vpop.f32.mrb[0].mxu0
  %v174 = vadd.f32 0.0, %v173
  %v175 = vpop.f32.mrb[0].mxu0
  %v176 = vpop.f32.mrb[0].mxu0
  %177 = vdwg.mxu0
  %v178 = vld [vmem:[%s3] sm:$0xff]
  %v179 = vld [vmem:[%s3 + $0x8] sm:$0xff]
  %v180 = vld [vmem:[%s3 + $0x10] sm:$0x3]
  %v181 = vld [vmem:[%s3 + $0x18] sm:$0x3]
  %182 = vrot.lane.b32.xlu0 %v172, 13
  %v183 = vpop.permute.xlu0 %182
  %184 = vrot.lane.b32.xlu0 %v174, 13
  %v185 = vpop.permute.xlu0 %184
  %v186 = vlaneseq
  %v187 = vand.u32 %v186, 127
  %vm188 = vcmp.lt.s32.totalorder %v187, 13
  %v189 = vsel %vm188, %v183, %v185
  %v190 = vsel %vm188, %v185, %v183
  %v191 = vlaneseq
  %v192 = vshrl.u32 %v191, 7
  %v193 = vsub.s32 0, %v192
  %v194 = vrot.slane %v178, %v193
  %v195 = vlaneseq
  %v196 = vshrl.u32 %v195, 7
  %v197 = vsub.s32 0, %v196
  %v198 = vrot.slane %v179, %v197
  %v199 = vmul.f32 %v190, %v194
  %v200 = vmul.f32 %v189, %v198
  %201 = vrot.lane.b32.xlu0 %v172, 12
  %v202 = vpop.permute.xlu0 %201
  %203 = vrot.lane.b32.xlu0 %v174, 12
  %v204 = vpop.permute.xlu0 %203
  %vm205 = vcmp.lt.s32.totalorder %v187, 12
  %v206 = vsel %vm205, %v202, %v204
  %v207 = vsel %vm205, %v204, %v202
  %v208 = vlaneseq
  %v209 = vshrl.u32 %v208, 7
  %v210 = vsub.s32 1, %v209
  %v211 = vrot.slane %v178, %v210
  %v212 = vlaneseq
  %v213 = vshrl.u32 %v212, 7
  %v214 = vsub.s32 1, %v213
  %v215 = vrot.slane %v179, %v214
  %v216 = vmul.f32 %v207, %v211
  %v217 = vmul.f32 %v206, %v215
  %218 = vrot.lane.b32.xlu0 %v172, 11
  %v219 = vpop.permute.xlu0 %218
  %220 = vrot.lane.b32.xlu0 %v174, 11
  %v221 = vpop.permute.xlu0 %220
  %vm222 = vcmp.lt.s32.totalorder %v187, 11
  %v223 = vsel %vm222, %v219, %v221
  %v224 = vsel %vm222, %v221, %v219
  %v225 = vlaneseq
  %v226 = vshrl.u32 %v225, 7
  %v227 = vsub.s32 2, %v226
  %v228 = vrot.slane %v178, %v227
  %v229 = vlaneseq
  %v230 = vshrl.u32 %v229, 7
  %v231 = vsub.s32 2, %v230
  %v232 = vrot.slane %v179, %v231
  %v233 = vmul.f32 %v224, %v228
  %v234 = vmul.f32 %v223, %v232
  %235 = vrot.lane.b32.xlu0 %v172, 1
  %v236 = vpop.permute.xlu0 %235
  %237 = vrot.lane.b32.xlu0 %v174, 1
  %v238 = vpop.permute.xlu0 %237
  %vm239 = vcmp.lt.s32.totalorder %v187, 1
  %v240 = vsel %vm239, %v236, %v238
  %v241 = vsel %vm239, %v238, %v236
  %v242 = vlaneseq
  %v243 = vshrl.u32 %v242, 7
  %v244 = vsub.s32 3, %v243
  %v245 = vrot.slane %v178, %v244
  %v246 = vlaneseq
  %v247 = vshrl.u32 %v246, 7
  %v248 = vsub.s32 3, %v247
  %v249 = vrot.slane %v179, %v248
  %v250 = vmul.f32 %v241, %v245
  %v251 = vmul.f32 %v240, %v249
  %252 = vrot.lane.b32.xlu0 %v172, 127
  %v253 = vpop.permute.xlu0 %252
  %254 = vrot.lane.b32.xlu0 %v174, 127
  %v255 = vpop.permute.xlu0 %254
  %vm256 = vcmp.lt.s32.totalorder %v187, 127
  %v257 = vsel %vm256, %v253, %v255
  %v258 = vsel %vm256, %v255, %v253
  %v259 = vlaneseq
  %v260 = vshrl.u32 %v259, 7
  %v261 = vsub.s32 5, %v260
  %v262 = vrot.slane %v178, %v261
  %v263 = vlaneseq
  %v264 = vshrl.u32 %v263, 7
  %v265 = vsub.s32 5, %v264
  %v266 = vrot.slane %v179, %v265
  %v267 = vmul.f32 %v257, %v262
  %v268 = vmul.f32 %v258, %v266
  %269 = vrot.lane.b32.xlu0 %v172, 117
  %v270 = vpop.permute.xlu0 %269
  %271 = vrot.lane.b32.xlu0 %v174, 117
  %v272 = vpop.permute.xlu0 %271
  %vm273 = vcmp.lt.s32.totalorder %v187, 117
  %v274 = vsel %vm273, %v270, %v272
  %v275 = vsel %vm273, %v272, %v270
  %v276 = vlaneseq
  %v277 = vshrl.u32 %v276, 7
  %v278 = vsub.s32 6, %v277
  %v279 = vrot.slane %v178, %v278
  %v280 = vlaneseq
  %v281 = vshrl.u32 %v280, 7
  %v282 = vsub.s32 6, %v281
  %v283 = vrot.slane %v179, %v282
  %v284 = vmul.f32 %v274, %v279
  %v285 = vmul.f32 %v275, %v283
  %286 = vrot.lane.b32.xlu0 %v172, 116
  %v287 = vpop.permute.xlu0 %286
  %288 = vrot.lane.b32.xlu0 %v174, 116
  %v289 = vpop.permute.xlu0 %288
  %vm290 = vcmp.lt.s32.totalorder %v187, 116
  %v291 = vsel %vm290, %v287, %v289
  %v292 = vsel %vm290, %v289, %v287
  %v293 = vlaneseq
  %v294 = vshrl.u32 %v293, 7
  %v295 = vsub.s32 7, %v294
  %v296 = vrot.slane %v178, %v295
  %v297 = vlaneseq
  %v298 = vshrl.u32 %v297, 7
  %v299 = vsub.s32 7, %v298
  %v300 = vrot.slane %v179, %v299
  %v301 = vmul.f32 %v291, %v296
  %v302 = vmul.f32 %v292, %v300
  %303 = vrot.lane.b32.xlu0 %v172, 115
  %v304 = vpop.permute.xlu0 %303
  %305 = vrot.lane.b32.xlu0 %v174, 115
  %v306 = vpop.permute.xlu0 %305
  %vm307 = vcmp.lt.s32.totalorder %v187, 115
  %v308 = vsel %vm307, %v304, %v306
  %v309 = vsel %vm307, %v306, %v304
  %v310 = vlaneseq
  %v311 = vshrl.u32 %v310, 7
  %v312 = vsub.s32 0, %v311
  %v313 = vrot.slane %v180, %v312
  %v314 = vlaneseq
  %v315 = vshrl.u32 %v314, 7
  %v316 = vsub.s32 0, %v315
  %v317 = vrot.slane %v181, %v316
  %v318 = vmul.f32 %v308, %v313
  %v319 = vmul.f32 %v309, %v317
  %v320 = vld [vmem:[%s6] sm:$0xff]
  %vm321 = vcmask 588800
  %v323 = vsel %vm321, %v320, 0
  %325 = vmatprep.subr.mxu0 %v200
  %326 = vmatpush1.msra.mxu0 %v199
  %327 = vmatprep.subr.mxu0 %v217
  %328 = vmatpush1.msra.mxu0 %v216
  %329 = vmatprep.subr.mxu0 %v234
  %330 = vmatpush1.msra.mxu0 %v233
  %331 = vmatprep.subr.mxu0 %v251
  %332 = vmatpush1.msra.mxu0 %v250
  %333 = vmatprep.subr.mxu0 %v174
  %334 = vmatpush1.msra.mxu0 %v172
  %335 = vmatprep.subr.mxu0 %v268
  %336 = vmatpush1.msra.mxu0 %v267
  %337 = vmatprep.subr.mxu0 %v285
  %338 = vmatpush1.msra.mxu0 %v284
  %339 = vmatprep.subr.mxu0 %v302
  %340 = vmatpush1.msra.mxu0 %v301
  %341 = vmatprep.subr.mxu0 %v319
  %342 = vmatpush1.msra.mxu0 %v318
  %343 = vmatprep.subr.mxu0 0.0
  %344 = vmatpush1.msra.mxu0 0.0
  %345 = vmatprep.subr.mxu0 0.0
  %346 = vmatpush1.msra.mxu0 0.0
  %347 = vmatprep.subr.mxu0 0.0
  %348 = vmatpush1.msra.mxu0 0.0
  %349 = vmatprep.subr.mxu0 0.0
  %350 = vmatpush1.msra.mxu0 0.0
  %351 = vmatprep.subr.mxu0 0.0
  %352 = vmatpush1.msra.mxu0 0.0
  %353 = vmatprep.subr.mxu0 0.0
  %354 = vmatpush1.msra.mxu0 0.0
  %355 = vmatprep.subr.mxu0 0.0
  %356 = vmatpush1.msra.mxu0 0.0
  %357 = vmatprep.subr.mxu0 0.0
  %358 = vmatpush1.msra.mxu0 0.0
  %359 = vmatprep.subr.mxu0 0.0
  %360 = vmatpush1.msra.mxu0 0.0
  %361 = vmatprep.subr.mxu0 0.0
  %362 = vmatpush1.msra.mxu0 0.0
  %363 = vmatprep.subr.mxu0 0.0
  %364 = vmatpush1.msra.mxu0 0.0
  %365 = vmatprep.subr.mxu0 0.0
  %366 = vmatpush1.msra.mxu0 0.0
  %367 = vmatprep.subr.mxu0 0.0
  %368 = vmatpush1.msra.mxu0 0.0
  %369 = vmatprep.subr.mxu0 0.0
  %370 = vmatpush1.msra.mxu0 0.0
  %371 = vmatprep.subr.mxu0 0.0
  %372 = vmatpush1.msra.mxu0 0.0
  %373 = vmatprep.subr.mxu0 0.0
  %374 = vmatpush1.msra.mxu0 0.0
  %375 = vmatprep.subr.mxu0 0.0
  %376 = vmatpush1.msra.mxu0 0.0
  %377 = vmatprep.subr.mxu0 0.0
  %378 = vmatpush1.msra.mxu0 0.0
  %379 = vmatprep.subr.mxu0 0.0
  %380 = vmatpush1.msra.mxu0 0.0
  %381 = vmatprep.subr.mxu0 0.0
  %382 = vmatpush1.msra.mxu0 0.0
  %383 = vmatprep.subr.mxu0 0.0
  %384 = vmatpush1.msra.mxu0 0.0
  %385 = vmatprep.subr.mxu0 0.0
  %386 = vmatpush1.msra.mxu0 0.0
  %387 = vmatprep.subr.mxu0 0.0
  %388 = vmatpush1.msra.mxu0 0.0
  %389 = vmatprep.mubr.f32.mxu0 0.0
  %390 = vmatmul.mubr.f32.gmra.mrb[0].mxu0 %v323
  %v391 = vpop.f32.mrb[0].mxu0
  %v392 = vadd.f32 0.0, %v391
  %v393 = vpop.f32.mrb[0].mxu0
  %v394 = vadd.f32 0.0, %v393
  %395 = vdwg.mxu0
  %v396 = vmul.f32 %v392, %v392
  %v397 = vmul.f32 %v394, %v394
  %v398 = vlaneseq
  %v399 = vshrl.u32 %v398, 7
  %v400 = vsub.s32 1, %v399
  %v401 = vrot.slane %v180, %v400
  %v402 = vlaneseq
  %v403 = vshrl.u32 %v402, 7
  %v404 = vsub.s32 1, %v403
  %v405 = vrot.slane %v181, %v404
  %v406 = vmul.f32 %v392, %v401
  %v407 = vmul.f32 %v394, %v405
  %v408 = vmul.f32 %v396, %v401
  %v409 = vmul.f32 %v397, %v405
  %v410 = vadd.f32 %v406, %v407
  %411 = vadd.xlane.f32.xlu0 %v410
  %v412 = vpop.xlane.xlu0 %411
  %v413 = vadd.f32 %v408, %v409
  %414 = vadd.xlane.f32.xlu0 %v413
  %v415 = vpop.xlane.xlu0 %414
  %v417 = vrot.slane %v412, 4
  %v419 = vadd.f32 %v412, %v417
  %v421 = vrot.slane %v415, 4
  %v423 = vadd.f32 %v415, %v421
  %v424 = vmul.f32 %v419, 0.0034722222
  %v425 = vmul.f32 %v423, 0.0034722222
  %v426 = vmul.f32 %v424, %v424
  %v427 = vsub.f32 %v425, %v426
  %v428 = vld [vmem:[%s7] sm:$0xf]
  %v429 = vadd.f32 %v427, 1e-05
  %v430 = vrsqrt.pop %v429
  %v431 = vmul.f32 %v428, %v430
  %v432 = vld [vmem:[%s8] sm:$0xf]
  %v433 = vmul.f32 %v424, %v431
  %v434 = vsub.f32 %v432, %v433
  %v436 = vrot.slane %v431, 4
  %vm438 = vcmask 1043456
  %v439 = vsel %vm438, %v431, %v436
  %v441 = vrot.slane %v434, 4
  %v443 = vsel %vm438, %v434, %v441
  %445 = vset.pattern.permute.xlu0 0
  %446 = vperm.xlu0 %445, %v439
  %v447 = vpop.permute.xlu0 %446
  %v449 = vmul.f32 %v392, %v447
  %v450 = vmul.f32 %v394, %v447
  %452 = vset.pattern.permute.xlu0 0
  %453 = vperm.xlu0 %452, %v443
  %v454 = vpop.permute.xlu0 %453
  %v456 = vadd.f32 %v449, %v454
  %v457 = vadd.f32 %v450, %v454
  %v458 = vsub.f32 0.0, %v456
  %v459 = vsub.f32 0.0, %v457
  %v460 = vmul.f32 %v458, 1.442695
  %v461 = vpow.pop %v460
  %v462 = vmul.f32 %v459, 1.442695
  %v463 = vpow.pop %v462
  %v464 = vadd.f32 %v461, 1.0
  %v465 = vadd.f32 %v463, 1.0
  %v466 = vrcp.pop %v464
  %v467 = vrcp.pop %v465
  %v468 = vmul.f32 %v456, %v466
  %v469 = vmul.f32 %v457, %v467
  %470 = vrot.lane.b32.xlu0 %v468, 13
  %v471 = vpop.permute.xlu0 %470
  %472 = vrot.lane.b32.xlu0 %v469, 13
  %v473 = vpop.permute.xlu0 %472
  %v474 = vsel %vm188, %v471, %v473
  %v475 = vsel %vm188, %v473, %v471
  %v476 = vmul.f32 %v475, %v194
  %v477 = vmul.f32 %v474, %v198
  %478 = vrot.lane.b32.xlu0 %v468, 12
  %v479 = vpop.permute.xlu0 %478
  %480 = vrot.lane.b32.xlu0 %v469, 12
  %v481 = vpop.permute.xlu0 %480
  %v482 = vsel %vm205, %v479, %v481
  %v483 = vsel %vm205, %v481, %v479
  %v484 = vmul.f32 %v483, %v211
  %v485 = vmul.f32 %v482, %v215
  %486 = vrot.lane.b32.xlu0 %v468, 11
  %v487 = vpop.permute.xlu0 %486
  %488 = vrot.lane.b32.xlu0 %v469, 11
  %v489 = vpop.permute.xlu0 %488
  %v490 = vsel %vm222, %v487, %v489
  %v491 = vsel %vm222, %v489, %v487
  %v492 = vmul.f32 %v491, %v228
  %v493 = vmul.f32 %v490, %v232
  %494 = vrot.lane.b32.xlu0 %v468, 1
  %v495 = vpop.permute.xlu0 %494
  %496 = vrot.lane.b32.xlu0 %v469, 1
  %v497 = vpop.permute.xlu0 %496
  %v498 = vsel %vm239, %v495, %v497
  %v499 = vsel %vm239, %v497, %v495
  %v500 = vmul.f32 %v499, %v245
  %v501 = vmul.f32 %v498, %v249
  %502 = vrot.lane.b32.xlu0 %v468, 127
  %v503 = vpop.permute.xlu0 %502
  %504 = vrot.lane.b32.xlu0 %v469, 127
  %v505 = vpop.permute.xlu0 %504
  %v506 = vsel %vm256, %v503, %v505
  %v507 = vsel %vm256, %v505, %v503
  %v508 = vmul.f32 %v506, %v262
  %v509 = vmul.f32 %v507, %v266
  %510 = vrot.lane.b32.xlu0 %v468, 117
  %v511 = vpop.permute.xlu0 %510
  %512 = vrot.lane.b32.xlu0 %v469, 117
  %v513 = vpop.permute.xlu0 %512
  %v514 = vsel %vm273, %v511, %v513
  %v515 = vsel %vm273, %v513, %v511
  %v516 = vmul.f32 %v514, %v279
  %v517 = vmul.f32 %v515, %v283
  %518 = vrot.lane.b32.xlu0 %v468, 116
  %v519 = vpop.permute.xlu0 %518
  %520 = vrot.lane.b32.xlu0 %v469, 116
  %v521 = vpop.permute.xlu0 %520
  %v522 = vsel %vm290, %v519, %v521
  %v523 = vsel %vm290, %v521, %v519
  %v524 = vmul.f32 %v522, %v296
  %v525 = vmul.f32 %v523, %v300
  %526 = vrot.lane.b32.xlu0 %v468, 115
  %v527 = vpop.permute.xlu0 %526
  %528 = vrot.lane.b32.xlu0 %v469, 115
  %v529 = vpop.permute.xlu0 %528
  %v530 = vsel %vm307, %v527, %v529
  %v531 = vsel %vm307, %v529, %v527
  %v532 = vmul.f32 %v530, %v313
  %v533 = vmul.f32 %v531, %v317
  %s534 = scalar_lea.vmem %s6, 8
  %v535 = vld [vmem:[%s534] sm:$0xff]
  %v537 = vsel %vm321, %v535, 0
  %539 = vmatprep.subr.mxu0 %v477
  %540 = vmatpush1.msra.mxu0 %v476
  %541 = vmatprep.subr.mxu0 %v485
  %542 = vmatpush1.msra.mxu0 %v484
  %543 = vmatprep.subr.mxu0 %v493
  %544 = vmatpush1.msra.mxu0 %v492
  %545 = vmatprep.subr.mxu0 %v501
  %546 = vmatpush1.msra.mxu0 %v500
  %547 = vmatprep.subr.mxu0 %v469
  %548 = vmatpush1.msra.mxu0 %v468
  %549 = vmatprep.subr.mxu0 %v509
  %550 = vmatpush1.msra.mxu0 %v508
  %551 = vmatprep.subr.mxu0 %v517
  %552 = vmatpush1.msra.mxu0 %v516
  %553 = vmatprep.subr.mxu0 %v525
  %554 = vmatpush1.msra.mxu0 %v524
  %555 = vmatprep.subr.mxu0 %v533
  %556 = vmatpush1.msra.mxu0 %v532
  %557 = vmatprep.subr.mxu0 0.0
  %558 = vmatpush1.msra.mxu0 0.0
  %559 = vmatprep.subr.mxu0 0.0
  %560 = vmatpush1.msra.mxu0 0.0
  %561 = vmatprep.subr.mxu0 0.0
  %562 = vmatpush1.msra.mxu0 0.0
  %563 = vmatprep.subr.mxu0 0.0
  %564 = vmatpush1.msra.mxu0 0.0
  %565 = vmatprep.subr.mxu0 0.0
  %566 = vmatpush1.msra.mxu0 0.0
  %567 = vmatprep.subr.mxu0 0.0
  %568 = vmatpush1.msra.mxu0 0.0
  %569 = vmatprep.subr.mxu0 0.0
  %570 = vmatpush1.msra.mxu0 0.0
  %571 = vmatprep.subr.mxu0 0.0
  %572 = vmatpush1.msra.mxu0 0.0
  %573 = vmatprep.subr.mxu0 0.0
  %574 = vmatpush1.msra.mxu0 0.0
  %575 = vmatprep.subr.mxu0 0.0
  %576 = vmatpush1.msra.mxu0 0.0
  %577 = vmatprep.subr.mxu0 0.0
  %578 = vmatpush1.msra.mxu0 0.0
  %579 = vmatprep.subr.mxu0 0.0
  %580 = vmatpush1.msra.mxu0 0.0
  %581 = vmatprep.subr.mxu0 0.0
  %582 = vmatpush1.msra.mxu0 0.0
  %583 = vmatprep.subr.mxu0 0.0
  %584 = vmatpush1.msra.mxu0 0.0
  %585 = vmatprep.subr.mxu0 0.0
  %586 = vmatpush1.msra.mxu0 0.0
  %587 = vmatprep.subr.mxu0 0.0
  %588 = vmatpush1.msra.mxu0 0.0
  %589 = vmatprep.subr.mxu0 0.0
  %590 = vmatpush1.msra.mxu0 0.0
  %591 = vmatprep.subr.mxu0 0.0
  %592 = vmatpush1.msra.mxu0 0.0
  %593 = vmatprep.subr.mxu0 0.0
  %594 = vmatpush1.msra.mxu0 0.0
  %595 = vmatprep.subr.mxu0 0.0
  %596 = vmatpush1.msra.mxu0 0.0
  %597 = vmatprep.subr.mxu0 0.0
  %598 = vmatpush1.msra.mxu0 0.0
  %599 = vmatprep.subr.mxu0 0.0
  %600 = vmatpush1.msra.mxu0 0.0
  %601 = vmatprep.subr.mxu0 0.0
  %602 = vmatpush1.msra.mxu0 0.0
  %603 = vmatprep.mubr.f32.mxu0 0.0
  %604 = vmatmul.mubr.f32.gmra.mrb[0].mxu0 %v537
  %v605 = vpop.f32.mrb[0].mxu0
  %v606 = vadd.f32 0.0, %v605
  %v607 = vpop.f32.mrb[0].mxu0
  %v608 = vadd.f32 0.0, %v607
  %609 = vdwg.mxu0
  %v610 = vmul.f32 %v606, %v606
  %v611 = vmul.f32 %v608, %v608
  %v612 = vmul.f32 %v606, %v401
  %v613 = vmul.f32 %v608, %v405
  %v614 = vmul.f32 %v610, %v401
  %v615 = vmul.f32 %v611, %v405
  %v616 = vadd.f32 %v612, %v613
  %617 = vadd.xlane.f32.xlu0 %v616
  %v618 = vpop.xlane.xlu0 %617
  %v619 = vadd.f32 %v614, %v615
  %620 = vadd.xlane.f32.xlu0 %v619
  %v621 = vpop.xlane.xlu0 %620
  %v623 = vrot.slane %v618, 4
  %v625 = vadd.f32 %v618, %v623
  %v627 = vrot.slane %v621, 4
  %v629 = vadd.f32 %v621, %v627
  %v630 = vmul.f32 %v625, 0.0034722222
  %v631 = vmul.f32 %v629, 0.0034722222
  %v632 = vmul.f32 %v630, %v630
  %v633 = vsub.f32 %v631, %v632
  %v634 = vadd.f32 %v633, 1e-05
  %v635 = vrsqrt.pop %v634
  %v636 = vmul.f32 %v428, %v635
  %v637 = vmul.f32 %v630, %v636
  %v638 = vsub.f32 %v432, %v637
  %v640 = vrot.slane %v636, 4
  %v642 = vsel %vm438, %v636, %v640
  %v644 = vrot.slane %v638, 4
  %v646 = vsel %vm438, %v638, %v644
  %648 = vset.pattern.permute.xlu0 0
  %649 = vperm.xlu0 %648, %v642
  %v650 = vpop.permute.xlu0 %649
  %v652 = vmul.f32 %v606, %v650
  %v653 = vmul.f32 %v608, %v650
  %655 = vset.pattern.permute.xlu0 0
  %656 = vperm.xlu0 %655, %v646
  %v657 = vpop.permute.xlu0 %656
  %v659 = vadd.f32 %v652, %v657
  %v660 = vadd.f32 %v653, %v657
  %v661 = vadd.f32 %v659, %v172
  %v662 = vadd.f32 %v660, %v174
  %v663 = vsub.f32 0.0, %v661
  %v664 = vsub.f32 0.0, %v662
  %v665 = vmul.f32 %v663, 1.442695
  %v666 = vpow.pop %v665
  %v667 = vmul.f32 %v664, 1.442695
  %v668 = vpow.pop %v667
  %v669 = vadd.f32 %v666, 1.0
  %v670 = vadd.f32 %v668, 1.0
  %v671 = vrcp.pop %v669
  %v672 = vrcp.pop %v670
  %v673 = vmul.f32 %v661, %v671
  %v674 = vmul.f32 %v662, %v672
  %v675 = vpack.c.bf16 %v673, %v673
  %v676 = vpack.c.bf16 %v674, %v674
  %v677 = vld [vmem:[%s2] sm:$0xff]
  %v678 = vld [vmem:[%s2 + $0x8] sm:$0xff]
  %v679 = vld [vmem:[%s2 + $0x10] sm:$0xff]
  %v680 = vld [vmem:[%s2 + $0x18] sm:$0xff]
  %v681 = vld [vmem:[%s2 + $0x20] sm:$0xff]
  %v682 = vld [vmem:[%s2 + $0x28] sm:$0xff]
  %v683 = vld [vmem:[%s2 + $0x30] sm:$0xff]
  %v684 = vld [vmem:[%s2 + $0x38] sm:$0xff]
  %v685 = vld [vmem:[%s2 + $0x40] sm:$0xff]
  %v686 = vld [vmem:[%s2 + $0x48] sm:$0xff]
  %v687 = vld [vmem:[%s2 + $0x50] sm:$0xff]
  %v688 = vld [vmem:[%s2 + $0x58] sm:$0xff]
  %v689 = vld [vmem:[%s2 + $0x60] sm:$0xff]
  %v690 = vld [vmem:[%s2 + $0x68] sm:$0xff]
  %v691 = vld [vmem:[%s2 + $0x70] sm:$0xff]
  %v692 = vld [vmem:[%s2 + $0x78] sm:$0xff]
  %v693 = vld [vmem:[%s2 + $0x80] sm:$0xff]
  %v694 = vld [vmem:[%s2 + $0x88] sm:$0xff]
  %v695 = vld [vmem:[%s2 + $0x90] sm:$0xff]
  %v696 = vld [vmem:[%s2 + $0x98] sm:$0xff]
  %v697 = vld [vmem:[%s2 + $0xa0] sm:$0xff]
  %v698 = vld [vmem:[%s2 + $0xa8] sm:$0xff]
  %v699 = vld [vmem:[%s2 + $0xb0] sm:$0xff]
  %v700 = vld [vmem:[%s2 + $0xb8] sm:$0xff]
  %v701 = vld [vmem:[%s2 + $0xc0] sm:$0xff]
  %v702 = vld [vmem:[%s2 + $0xc8] sm:$0xff]
  %v703 = vld [vmem:[%s2 + $0xd0] sm:$0xff]
  %v704 = vld [vmem:[%s2 + $0xd8] sm:$0xff]
  %v705 = vld [vmem:[%s2 + $0xe0] sm:$0xff]
  %v706 = vld [vmem:[%s2 + $0xe8] sm:$0xff]
  %v707 = vld [vmem:[%s2 + $0xf0] sm:$0xff]
  %v708 = vld [vmem:[%s2 + $0xf8] sm:$0xff]
  %v741 = vunpack.c.l.b16 %v677
  %v742 = vunpack.c.h.b16 %v677
  %v743 = vunpack.c.l.b16 %v678
  %v744 = vunpack.c.h.b16 %v678
  %v745 = vunpack.c.l.b16 %v679
  %v746 = vunpack.c.h.b16 %v679
  %v747 = vunpack.c.l.b16 %v680
  %v748 = vunpack.c.h.b16 %v680
  %v749 = vunpack.c.l.b16 %v681
  %v750 = vunpack.c.h.b16 %v681
  %v751 = vunpack.c.l.b16 %v682
  %v752 = vunpack.c.h.b16 %v682
  %v753 = vunpack.c.l.b16 %v683
  %v754 = vunpack.c.h.b16 %v683
  %v755 = vunpack.c.l.b16 %v684
  %v756 = vunpack.c.h.b16 %v684
  %v757 = vunpack.c.l.b16 %v685
  %v758 = vunpack.c.h.b16 %v685
  %v759 = vunpack.c.l.b16 %v686
  %v760 = vunpack.c.h.b16 %v686
  %v761 = vunpack.c.l.b16 %v687
  %v762 = vunpack.c.h.b16 %v687
  %v763 = vunpack.c.l.b16 %v688
  %v764 = vunpack.c.h.b16 %v688
  %v765 = vunpack.c.l.b16 %v689
  %v766 = vunpack.c.h.b16 %v689
  %v767 = vunpack.c.l.b16 %v690
  %v768 = vunpack.c.h.b16 %v690
  %v769 = vunpack.c.l.b16 %v691
  %v770 = vunpack.c.h.b16 %v691
  %v771 = vunpack.c.l.b16 %v692
  %v772 = vunpack.c.h.b16 %v692
  %v773 = vunpack.c.l.b16 %v693
  %v774 = vunpack.c.h.b16 %v693
  %v775 = vunpack.c.l.b16 %v694
  %v776 = vunpack.c.h.b16 %v694
  %v777 = vunpack.c.l.b16 %v695
  %v778 = vunpack.c.h.b16 %v695
  %v779 = vunpack.c.l.b16 %v696
  %v780 = vunpack.c.h.b16 %v696
  %v781 = vunpack.c.l.b16 %v697
  %v782 = vunpack.c.h.b16 %v697
  %v783 = vunpack.c.l.b16 %v698
  %v784 = vunpack.c.h.b16 %v698
  %v785 = vunpack.c.l.b16 %v699
  %v786 = vunpack.c.h.b16 %v699
  %v787 = vunpack.c.l.b16 %v700
  %v788 = vunpack.c.h.b16 %v700
  %v789 = vunpack.c.l.b16 %v701
  %v790 = vunpack.c.h.b16 %v701
  %v791 = vunpack.c.l.b16 %v702
  %v792 = vunpack.c.h.b16 %v702
  %v793 = vunpack.c.l.b16 %v703
  %v794 = vunpack.c.h.b16 %v703
  %v795 = vunpack.c.l.b16 %v704
  %v796 = vunpack.c.h.b16 %v704
  %v797 = vunpack.c.l.b16 %v705
  %v798 = vunpack.c.h.b16 %v705
  %v799 = vunpack.c.l.b16 %v706
  %v800 = vunpack.c.h.b16 %v706
  %v801 = vunpack.c.l.b16 %v707
  %v802 = vunpack.c.h.b16 %v707
  %v803 = vunpack.c.l.b16 %v708
  %v804 = vunpack.c.h.b16 %v708
  %v805 = vpack.c.b16 %v743, %v741
  %v806 = vpack.c.b16 %v744, %v742
  %v807 = vpack.c.b16 %v747, %v745
  %v808 = vpack.c.b16 %v748, %v746
  %v809 = vpack.c.b16 %v751, %v749
  %v810 = vpack.c.b16 %v752, %v750
  %v811 = vpack.c.b16 %v755, %v753
  %v812 = vpack.c.b16 %v756, %v754
  %v813 = vpack.c.b16 %v759, %v757
  %v814 = vpack.c.b16 %v760, %v758
  %v815 = vpack.c.b16 %v763, %v761
  %v816 = vpack.c.b16 %v764, %v762
  %v817 = vpack.c.b16 %v767, %v765
  %v818 = vpack.c.b16 %v768, %v766
  %v819 = vpack.c.b16 %v771, %v769
  %v820 = vpack.c.b16 %v772, %v770
  %v821 = vpack.c.b16 %v775, %v773
  %v822 = vpack.c.b16 %v776, %v774
  %v823 = vpack.c.b16 %v779, %v777
  %v824 = vpack.c.b16 %v780, %v778
  %v825 = vpack.c.b16 %v783, %v781
  %v826 = vpack.c.b16 %v784, %v782
  %v827 = vpack.c.b16 %v787, %v785
  %v828 = vpack.c.b16 %v788, %v786
  %v829 = vpack.c.b16 %v791, %v789
  %v830 = vpack.c.b16 %v792, %v790
  %v831 = vpack.c.b16 %v795, %v793
  %v832 = vpack.c.b16 %v796, %v794
  %v833 = vpack.c.b16 %v799, %v797
  %v834 = vpack.c.b16 %v800, %v798
  %v835 = vpack.c.b16 %v803, %v801
  %v836 = vpack.c.b16 %v804, %v802
  %869 = vmatprep.subr.bf16.mxu0 %v806
  %870 = vmatpush1.bf16.msra.mxu0 %v805
  %871 = vmatprep.subr.bf16.mxu0 %v808
  %872 = vmatpush1.bf16.msra.mxu0 %v807
  %873 = vmatprep.subr.bf16.mxu0 %v810
  %874 = vmatpush1.bf16.msra.mxu0 %v809
  %875 = vmatprep.subr.bf16.mxu0 %v812
  %876 = vmatpush1.bf16.msra.mxu0 %v811
  %877 = vmatprep.subr.bf16.mxu0 %v814
  %878 = vmatpush1.bf16.msra.mxu0 %v813
  %879 = vmatprep.subr.bf16.mxu0 %v816
  %880 = vmatpush1.bf16.msra.mxu0 %v815
  %881 = vmatprep.subr.bf16.mxu0 %v818
  %882 = vmatpush1.bf16.msra.mxu0 %v817
  %883 = vmatprep.subr.bf16.mxu0 %v820
  %884 = vmatpush1.bf16.msra.mxu0 %v819
  %885 = vmatprep.subr.bf16.mxu0 %v822
  %886 = vmatpush1.bf16.msra.mxu0 %v821
  %887 = vmatprep.subr.bf16.mxu0 %v824
  %888 = vmatpush1.bf16.msra.mxu0 %v823
  %889 = vmatprep.subr.bf16.mxu0 %v826
  %890 = vmatpush1.bf16.msra.mxu0 %v825
  %891 = vmatprep.subr.bf16.mxu0 %v828
  %892 = vmatpush1.bf16.msra.mxu0 %v827
  %893 = vmatprep.subr.bf16.mxu0 %v830
  %894 = vmatpush1.bf16.msra.mxu0 %v829
  %895 = vmatprep.subr.bf16.mxu0 %v832
  %896 = vmatpush1.bf16.msra.mxu0 %v831
  %897 = vmatprep.subr.bf16.mxu0 %v834
  %898 = vmatpush1.bf16.msra.mxu0 %v833
  %899 = vmatprep.subr.bf16.mxu0 %v836
  %900 = vmatpush1.bf16.msra.mxu0 %v835
  %901 = vmatprep.mubr.bf16.mxu0 %v676
  %902 = vmatmul.mubr.bf16.gmra.mrb[0].mxu0 %v675
  %v903 = vpop.f32.mrb[0].mxu0
  %v904 = vadd.f32 0.0, %v903
  %v905 = vpop.f32.mrb[0].mxu0
  %v906 = vadd.f32 0.0, %v905
  %v907 = vpop.f32.mrb[0].mxu0
  %v908 = vpop.f32.mrb[0].mxu0
  %909 = vdwg.mxu0
  %v910 = vld [vmem:[%s4] sm:$0xff]
  %v911 = vld [vmem:[%s4 + $0x8] sm:$0xff]
  %v912 = vld [vmem:[%s4 + $0x10] sm:$0x3]
  %v913 = vld [vmem:[%s4 + $0x18] sm:$0x3]
  %914 = vrot.lane.b32.xlu0 %v904, 17
  %v915 = vpop.permute.xlu0 %914
  %916 = vrot.lane.b32.xlu0 %v906, 17
  %v917 = vpop.permute.xlu0 %916
  %vm918 = vcmp.lt.s32.totalorder %v187, 17
  %v919 = vsel %vm918, %v915, %v917
  %v920 = vsel %vm918, %v917, %v915
  %v921 = vlaneseq
  %v922 = vshrl.u32 %v921, 7
  %v923 = vsub.s32 0, %v922
  %v924 = vrot.slane %v910, %v923
  %v925 = vlaneseq
  %v926 = vshrl.u32 %v925, 7
  %v927 = vsub.s32 0, %v926
  %v928 = vrot.slane %v911, %v927
  %v929 = vmul.f32 %v920, %v924
  %v930 = vmul.f32 %v919, %v928
  %931 = vrot.lane.b32.xlu0 %v904, 16
  %v932 = vpop.permute.xlu0 %931
  %933 = vrot.lane.b32.xlu0 %v906, 16
  %v934 = vpop.permute.xlu0 %933
  %vm935 = vcmp.lt.s32.totalorder %v187, 16
  %v936 = vsel %vm935, %v932, %v934
  %v937 = vsel %vm935, %v934, %v932
  %v938 = vlaneseq
  %v939 = vshrl.u32 %v938, 7
  %v940 = vsub.s32 1, %v939
  %v941 = vrot.slane %v910, %v940
  %v942 = vlaneseq
  %v943 = vshrl.u32 %v942, 7
  %v944 = vsub.s32 1, %v943
  %v945 = vrot.slane %v911, %v944
  %v946 = vmul.f32 %v937, %v941
  %v947 = vmul.f32 %v936, %v945
  %948 = vrot.lane.b32.xlu0 %v904, 15
  %v949 = vpop.permute.xlu0 %948
  %950 = vrot.lane.b32.xlu0 %v906, 15
  %v951 = vpop.permute.xlu0 %950
  %vm952 = vcmp.lt.s32.totalorder %v187, 15
  %v953 = vsel %vm952, %v949, %v951
  %v954 = vsel %vm952, %v951, %v949
  %v955 = vlaneseq
  %v956 = vshrl.u32 %v955, 7
  %v957 = vsub.s32 2, %v956
  %v958 = vrot.slane %v910, %v957
  %v959 = vlaneseq
  %v960 = vshrl.u32 %v959, 7
  %v961 = vsub.s32 2, %v960
  %v962 = vrot.slane %v911, %v961
  %v963 = vmul.f32 %v954, %v958
  %v964 = vmul.f32 %v953, %v962
  %965 = vrot.lane.b32.xlu0 %v904, 1
  %v966 = vpop.permute.xlu0 %965
  %967 = vrot.lane.b32.xlu0 %v906, 1
  %v968 = vpop.permute.xlu0 %967
  %v969 = vsel %vm239, %v966, %v968
  %v970 = vsel %vm239, %v968, %v966
  %v971 = vlaneseq
  %v972 = vshrl.u32 %v971, 7
  %v973 = vsub.s32 3, %v972
  %v974 = vrot.slane %v910, %v973
  %v975 = vlaneseq
  %v976 = vshrl.u32 %v975, 7
  %v977 = vsub.s32 3, %v976
  %v978 = vrot.slane %v911, %v977
  %v979 = vmul.f32 %v970, %v974
  %v980 = vmul.f32 %v969, %v978
  %981 = vrot.lane.b32.xlu0 %v904, 127
  %v982 = vpop.permute.xlu0 %981
  %983 = vrot.lane.b32.xlu0 %v906, 127
  %v984 = vpop.permute.xlu0 %983
  %v985 = vsel %vm256, %v982, %v984
  %v986 = vsel %vm256, %v984, %v982
  %v987 = vlaneseq
  %v988 = vshrl.u32 %v987, 7
  %v989 = vsub.s32 5, %v988
  %v990 = vrot.slane %v910, %v989
  %v991 = vlaneseq
  %v992 = vshrl.u32 %v991, 7
  %v993 = vsub.s32 5, %v992
  %v994 = vrot.slane %v911, %v993
  %v995 = vmul.f32 %v985, %v990
  %v996 = vmul.f32 %v986, %v994
  %997 = vrot.lane.b32.xlu0 %v904, 113
  %v998 = vpop.permute.xlu0 %997
  %999 = vrot.lane.b32.xlu0 %v906, 113
  %v1000 = vpop.permute.xlu0 %999
  %vm1001 = vcmp.lt.s32.totalorder %v187, 113
  %v1002 = vsel %vm1001, %v998, %v1000
  %v1003 = vsel %vm1001, %v1000, %v998
  %v1004 = vlaneseq
  %v1005 = vshrl.u32 %v1004, 7
  %v1006 = vsub.s32 6, %v1005
  %v1007 = vrot.slane %v910, %v1006
  %v1008 = vlaneseq
  %v1009 = vshrl.u32 %v1008, 7
  %v1010 = vsub.s32 6, %v1009
  %v1011 = vrot.slane %v911, %v1010
  %v1012 = vmul.f32 %v1002, %v1007
  %v1013 = vmul.f32 %v1003, %v1011
  %1014 = vrot.lane.b32.xlu0 %v904, 112
  %v1015 = vpop.permute.xlu0 %1014
  %1016 = vrot.lane.b32.xlu0 %v906, 112
  %v1017 = vpop.permute.xlu0 %1016
  %vm1018 = vcmp.lt.s32.totalorder %v187, 112
  %v1019 = vsel %vm1018, %v1015, %v1017
  %v1020 = vsel %vm1018, %v1017, %v1015
  %v1021 = vlaneseq
  %v1022 = vshrl.u32 %v1021, 7
  %v1023 = vsub.s32 7, %v1022
  %v1024 = vrot.slane %v910, %v1023
  %v1025 = vlaneseq
  %v1026 = vshrl.u32 %v1025, 7
  %v1027 = vsub.s32 7, %v1026
  %v1028 = vrot.slane %v911, %v1027
  %v1029 = vmul.f32 %v1019, %v1024
  %v1030 = vmul.f32 %v1020, %v1028
  %1031 = vrot.lane.b32.xlu0 %v904, 111
  %v1032 = vpop.permute.xlu0 %1031
  %1033 = vrot.lane.b32.xlu0 %v906, 111
  %v1034 = vpop.permute.xlu0 %1033
  %vm1035 = vcmp.lt.s32.totalorder %v187, 111
  %v1036 = vsel %vm1035, %v1032, %v1034
  %v1037 = vsel %vm1035, %v1034, %v1032
  %v1038 = vlaneseq
  %v1039 = vshrl.u32 %v1038, 7
  %v1040 = vsub.s32 0, %v1039
  %v1041 = vrot.slane %v912, %v1040
  %v1042 = vlaneseq
  %v1043 = vshrl.u32 %v1042, 7
  %v1044 = vsub.s32 0, %v1043
  %v1045 = vrot.slane %v913, %v1044
  %v1046 = vmul.f32 %v1036, %v1041
  %v1047 = vmul.f32 %v1037, %v1045
  %s1048 = scalar_lea.vmem %s6, 16
  %v1049 = vld [vmem:[%s1048] sm:$0xff]
  %v1051 = vsel %vm321, %v1049, 0
  %1053 = vmatprep.subr.mxu0 %v930
  %1054 = vmatpush1.msra.mxu0 %v929
  %1055 = vmatprep.subr.mxu0 %v947
  %1056 = vmatpush1.msra.mxu0 %v946
  %1057 = vmatprep.subr.mxu0 %v964
  %1058 = vmatpush1.msra.mxu0 %v963
  %1059 = vmatprep.subr.mxu0 %v980
  %1060 = vmatpush1.msra.mxu0 %v979
  %1061 = vmatprep.subr.mxu0 %v906
  %1062 = vmatpush1.msra.mxu0 %v904
  %1063 = vmatprep.subr.mxu0 %v996
  %1064 = vmatpush1.msra.mxu0 %v995
  %1065 = vmatprep.subr.mxu0 %v1013
  %1066 = vmatpush1.msra.mxu0 %v1012
  %1067 = vmatprep.subr.mxu0 %v1030
  %1068 = vmatpush1.msra.mxu0 %v1029
  %1069 = vmatprep.subr.mxu0 %v1047
  %1070 = vmatpush1.msra.mxu0 %v1046
  %1071 = vmatprep.subr.mxu0 0.0
  %1072 = vmatpush1.msra.mxu0 0.0
  %1073 = vmatprep.subr.mxu0 0.0
  %1074 = vmatpush1.msra.mxu0 0.0
  %1075 = vmatprep.subr.mxu0 0.0
  %1076 = vmatpush1.msra.mxu0 0.0
  %1077 = vmatprep.subr.mxu0 0.0
  %1078 = vmatpush1.msra.mxu0 0.0
  %1079 = vmatprep.subr.mxu0 0.0
  %1080 = vmatpush1.msra.mxu0 0.0
  %1081 = vmatprep.subr.mxu0 0.0
  %1082 = vmatpush1.msra.mxu0 0.0
  %1083 = vmatprep.subr.mxu0 0.0
  %1084 = vmatpush1.msra.mxu0 0.0
  %1085 = vmatprep.subr.mxu0 0.0
  %1086 = vmatpush1.msra.mxu0 0.0
  %1087 = vmatprep.subr.mxu0 0.0
  %1088 = vmatpush1.msra.mxu0 0.0
  %1089 = vmatprep.subr.mxu0 0.0
  %1090 = vmatpush1.msra.mxu0 0.0
  %1091 = vmatprep.subr.mxu0 0.0
  %1092 = vmatpush1.msra.mxu0 0.0
  %1093 = vmatprep.subr.mxu0 0.0
  %1094 = vmatpush1.msra.mxu0 0.0
  %1095 = vmatprep.subr.mxu0 0.0
  %1096 = vmatpush1.msra.mxu0 0.0
  %1097 = vmatprep.subr.mxu0 0.0
  %1098 = vmatpush1.msra.mxu0 0.0
  %1099 = vmatprep.subr.mxu0 0.0
  %1100 = vmatpush1.msra.mxu0 0.0
  %1101 = vmatprep.subr.mxu0 0.0
  %1102 = vmatpush1.msra.mxu0 0.0
  %1103 = vmatprep.subr.mxu0 0.0
  %1104 = vmatpush1.msra.mxu0 0.0
  %1105 = vmatprep.subr.mxu0 0.0
  %1106 = vmatpush1.msra.mxu0 0.0
  %1107 = vmatprep.subr.mxu0 0.0
  %1108 = vmatpush1.msra.mxu0 0.0
  %1109 = vmatprep.subr.mxu0 0.0
  %1110 = vmatpush1.msra.mxu0 0.0
  %1111 = vmatprep.subr.mxu0 0.0
  %1112 = vmatpush1.msra.mxu0 0.0
  %1113 = vmatprep.subr.mxu0 0.0
  %1114 = vmatpush1.msra.mxu0 0.0
  %1115 = vmatprep.subr.mxu0 0.0
  %1116 = vmatpush1.msra.mxu0 0.0
  %1117 = vmatprep.mubr.f32.mxu0 0.0
  %1118 = vmatmul.mubr.f32.gmra.mrb[0].mxu0 %v1051
  %v1119 = vpop.f32.mrb[0].mxu0
  %v1120 = vadd.f32 0.0, %v1119
  %v1121 = vpop.f32.mrb[0].mxu0
  %v1122 = vadd.f32 0.0, %v1121
  %1123 = vdwg.mxu0
  %v1124 = vmul.f32 %v1120, %v1120
  %v1125 = vmul.f32 %v1122, %v1122
  %v1126 = vlaneseq
  %v1127 = vshrl.u32 %v1126, 7
  %v1128 = vsub.s32 1, %v1127
  %v1129 = vrot.slane %v912, %v1128
  %v1130 = vlaneseq
  %v1131 = vshrl.u32 %v1130, 7
  %v1132 = vsub.s32 1, %v1131
  %v1133 = vrot.slane %v913, %v1132
  %v1134 = vmul.f32 %v1120, %v1129
  %v1135 = vmul.f32 %v1122, %v1133
  %v1136 = vmul.f32 %v1124, %v1129
  %v1137 = vmul.f32 %v1125, %v1133
  %v1138 = vadd.f32 %v1134, %v1135
  %1139 = vadd.xlane.f32.xlu0 %v1138
  %v1140 = vpop.xlane.xlu0 %1139
  %v1141 = vadd.f32 %v1136, %v1137
  %1142 = vadd.xlane.f32.xlu0 %v1141
  %v1143 = vpop.xlane.xlu0 %1142
  %v1145 = vrot.slane %v1140, 4
  %v1147 = vadd.f32 %v1140, %v1145
  %v1149 = vrot.slane %v1143, 4
  %v1151 = vadd.f32 %v1143, %v1149
  %v1152 = vmul.f32 %v1147, 0.001953125
  %v1153 = vmul.f32 %v1151, 0.001953125
  %v1154 = vmul.f32 %v1152, %v1152
  %v1155 = vsub.f32 %v1153, %v1154
  %s1156 = scalar_lea.vmem %s7, 4
  %v1157 = vld [vmem:[%s1156] sm:$0xf]
  %v1158 = vadd.f32 %v1155, 1e-05
  %v1159 = vrsqrt.pop %v1158
  %v1160 = vmul.f32 %v1157, %v1159
  %s1161 = scalar_lea.vmem %s8, 4
  %v1162 = vld [vmem:[%s1161] sm:$0xf]
  %v1163 = vmul.f32 %v1152, %v1160
  %v1164 = vsub.f32 %v1162, %v1163
  %v1166 = vrot.slane %v1160, 4
  %v1168 = vsel %vm438, %v1160, %v1166
  %v1170 = vrot.slane %v1164, 4
  %v1172 = vsel %vm438, %v1164, %v1170
  %1174 = vset.pattern.permute.xlu0 0
  %1175 = vperm.xlu0 %1174, %v1168
  %v1176 = vpop.permute.xlu0 %1175
  %v1178 = vmul.f32 %v1120, %v1176
  %v1179 = vmul.f32 %v1122, %v1176
  %1181 = vset.pattern.permute.xlu0 0
  %1182 = vperm.xlu0 %1181, %v1172
  %v1183 = vpop.permute.xlu0 %1182
  %v1185 = vadd.f32 %v1178, %v1183
  %v1186 = vadd.f32 %v1179, %v1183
  %v1187 = vsub.f32 0.0, %v1185
  %v1188 = vsub.f32 0.0, %v1186
  %v1189 = vmul.f32 %v1187, 1.442695
  %v1190 = vpow.pop %v1189
  %v1191 = vmul.f32 %v1188, 1.442695
  %v1192 = vpow.pop %v1191
  %v1193 = vadd.f32 %v1190, 1.0
  %v1194 = vadd.f32 %v1192, 1.0
  %v1195 = vrcp.pop %v1193
  %v1196 = vrcp.pop %v1194
  %v1197 = vmul.f32 %v1185, %v1195
  %v1198 = vmul.f32 %v1186, %v1196
  %1199 = vrot.lane.b32.xlu0 %v1197, 17
  %v1200 = vpop.permute.xlu0 %1199
  %1201 = vrot.lane.b32.xlu0 %v1198, 17
  %v1202 = vpop.permute.xlu0 %1201
  %v1203 = vsel %vm918, %v1200, %v1202
  %v1204 = vsel %vm918, %v1202, %v1200
  %v1205 = vmul.f32 %v1204, %v924
  %v1206 = vmul.f32 %v1203, %v928
  %1207 = vrot.lane.b32.xlu0 %v1197, 16
  %v1208 = vpop.permute.xlu0 %1207
  %1209 = vrot.lane.b32.xlu0 %v1198, 16
  %v1210 = vpop.permute.xlu0 %1209
  %v1211 = vsel %vm935, %v1208, %v1210
  %v1212 = vsel %vm935, %v1210, %v1208
  %v1213 = vmul.f32 %v1212, %v941
  %v1214 = vmul.f32 %v1211, %v945
  %1215 = vrot.lane.b32.xlu0 %v1197, 15
  %v1216 = vpop.permute.xlu0 %1215
  %1217 = vrot.lane.b32.xlu0 %v1198, 15
  %v1218 = vpop.permute.xlu0 %1217
  %v1219 = vsel %vm952, %v1216, %v1218
  %v1220 = vsel %vm952, %v1218, %v1216
  %v1221 = vmul.f32 %v1220, %v958
  %v1222 = vmul.f32 %v1219, %v962
  %1223 = vrot.lane.b32.xlu0 %v1197, 1
  %v1224 = vpop.permute.xlu0 %1223
  %1225 = vrot.lane.b32.xlu0 %v1198, 1
  %v1226 = vpop.permute.xlu0 %1225
  %v1227 = vsel %vm239, %v1224, %v1226
  %v1228 = vsel %vm239, %v1226, %v1224
  %v1229 = vmul.f32 %v1228, %v974
  %v1230 = vmul.f32 %v1227, %v978
  %1231 = vrot.lane.b32.xlu0 %v1197, 127
  %v1232 = vpop.permute.xlu0 %1231
  %1233 = vrot.lane.b32.xlu0 %v1198, 127
  %v1234 = vpop.permute.xlu0 %1233
  %v1235 = vsel %vm256, %v1232, %v1234
  %v1236 = vsel %vm256, %v1234, %v1232
  %v1237 = vmul.f32 %v1235, %v990
  %v1238 = vmul.f32 %v1236, %v994
  %1239 = vrot.lane.b32.xlu0 %v1197, 113
  %v1240 = vpop.permute.xlu0 %1239
  %1241 = vrot.lane.b32.xlu0 %v1198, 113
  %v1242 = vpop.permute.xlu0 %1241
  %v1243 = vsel %vm1001, %v1240, %v1242
  %v1244 = vsel %vm1001, %v1242, %v1240
  %v1245 = vmul.f32 %v1243, %v1007
  %v1246 = vmul.f32 %v1244, %v1011
  %1247 = vrot.lane.b32.xlu0 %v1197, 112
  %v1248 = vpop.permute.xlu0 %1247
  %1249 = vrot.lane.b32.xlu0 %v1198, 112
  %v1250 = vpop.permute.xlu0 %1249
  %v1251 = vsel %vm1018, %v1248, %v1250
  %v1252 = vsel %vm1018, %v1250, %v1248
  %v1253 = vmul.f32 %v1251, %v1024
  %v1254 = vmul.f32 %v1252, %v1028
  %1255 = vrot.lane.b32.xlu0 %v1197, 111
  %v1256 = vpop.permute.xlu0 %1255
  %1257 = vrot.lane.b32.xlu0 %v1198, 111
  %v1258 = vpop.permute.xlu0 %1257
  %v1259 = vsel %vm1035, %v1256, %v1258
  %v1260 = vsel %vm1035, %v1258, %v1256
  %v1261 = vmul.f32 %v1259, %v1041
  %v1262 = vmul.f32 %v1260, %v1045
  %s1263 = scalar_lea.vmem %s6, 24
  %v1264 = vld [vmem:[%s1263] sm:$0xff]
  %v1266 = vsel %vm321, %v1264, 0
  %1268 = vmatprep.subr.mxu0 %v1206
  %1269 = vmatpush1.msra.mxu0 %v1205
  %1270 = vmatprep.subr.mxu0 %v1214
  %1271 = vmatpush1.msra.mxu0 %v1213
  %1272 = vmatprep.subr.mxu0 %v1222
  %1273 = vmatpush1.msra.mxu0 %v1221
  %1274 = vmatprep.subr.mxu0 %v1230
  %1275 = vmatpush1.msra.mxu0 %v1229
  %1276 = vmatprep.subr.mxu0 %v1198
  %1277 = vmatpush1.msra.mxu0 %v1197
  %1278 = vmatprep.subr.mxu0 %v1238
  %1279 = vmatpush1.msra.mxu0 %v1237
  %1280 = vmatprep.subr.mxu0 %v1246
  %1281 = vmatpush1.msra.mxu0 %v1245
  %1282 = vmatprep.subr.mxu0 %v1254
  %1283 = vmatpush1.msra.mxu0 %v1253
  %1284 = vmatprep.subr.mxu0 %v1262
  %1285 = vmatpush1.msra.mxu0 %v1261
  %1286 = vmatprep.subr.mxu0 0.0
  %1287 = vmatpush1.msra.mxu0 0.0
  %1288 = vmatprep.subr.mxu0 0.0
  %1289 = vmatpush1.msra.mxu0 0.0
  %1290 = vmatprep.subr.mxu0 0.0
  %1291 = vmatpush1.msra.mxu0 0.0
  %1292 = vmatprep.subr.mxu0 0.0
  %1293 = vmatpush1.msra.mxu0 0.0
  %1294 = vmatprep.subr.mxu0 0.0
  %1295 = vmatpush1.msra.mxu0 0.0
  %1296 = vmatprep.subr.mxu0 0.0
  %1297 = vmatpush1.msra.mxu0 0.0
  %1298 = vmatprep.subr.mxu0 0.0
  %1299 = vmatpush1.msra.mxu0 0.0
  %1300 = vmatprep.subr.mxu0 0.0
  %1301 = vmatpush1.msra.mxu0 0.0
  %1302 = vmatprep.subr.mxu0 0.0
  %1303 = vmatpush1.msra.mxu0 0.0
  %1304 = vmatprep.subr.mxu0 0.0
  %1305 = vmatpush1.msra.mxu0 0.0
  %1306 = vmatprep.subr.mxu0 0.0
  %1307 = vmatpush1.msra.mxu0 0.0
  %1308 = vmatprep.subr.mxu0 0.0
  %1309 = vmatpush1.msra.mxu0 0.0
  %1310 = vmatprep.subr.mxu0 0.0
  %1311 = vmatpush1.msra.mxu0 0.0
  %1312 = vmatprep.subr.mxu0 0.0
  %1313 = vmatpush1.msra.mxu0 0.0
  %1314 = vmatprep.subr.mxu0 0.0
  %1315 = vmatpush1.msra.mxu0 0.0
  %1316 = vmatprep.subr.mxu0 0.0
  %1317 = vmatpush1.msra.mxu0 0.0
  %1318 = vmatprep.subr.mxu0 0.0
  %1319 = vmatpush1.msra.mxu0 0.0
  %1320 = vmatprep.subr.mxu0 0.0
  %1321 = vmatpush1.msra.mxu0 0.0
  %1322 = vmatprep.subr.mxu0 0.0
  %1323 = vmatpush1.msra.mxu0 0.0
  %1324 = vmatprep.subr.mxu0 0.0
  %1325 = vmatpush1.msra.mxu0 0.0
  %1326 = vmatprep.subr.mxu0 0.0
  %1327 = vmatpush1.msra.mxu0 0.0
  %1328 = vmatprep.subr.mxu0 0.0
  %1329 = vmatpush1.msra.mxu0 0.0
  %1330 = vmatprep.subr.mxu0 0.0
  %1331 = vmatpush1.msra.mxu0 0.0
  %1332 = vmatprep.mubr.f32.mxu0 0.0
  %1333 = vmatmul.mubr.f32.gmra.mrb[0].mxu0 %v1266
  %v1334 = vpop.f32.mrb[0].mxu0
  %v1335 = vadd.f32 0.0, %v1334
  %v1336 = vpop.f32.mrb[0].mxu0
  %v1337 = vadd.f32 0.0, %v1336
  %1338 = vdwg.mxu0
  %v1339 = vmul.f32 %v1335, %v1335
  %v1340 = vmul.f32 %v1337, %v1337
  %v1341 = vmul.f32 %v1335, %v1129
  %v1342 = vmul.f32 %v1337, %v1133
  %v1343 = vmul.f32 %v1339, %v1129
  %v1344 = vmul.f32 %v1340, %v1133
  %v1345 = vadd.f32 %v1341, %v1342
  %1346 = vadd.xlane.f32.xlu0 %v1345
  %v1347 = vpop.xlane.xlu0 %1346
  %v1348 = vadd.f32 %v1343, %v1344
  %1349 = vadd.xlane.f32.xlu0 %v1348
  %v1350 = vpop.xlane.xlu0 %1349
  %v1352 = vrot.slane %v1347, 4
  %v1354 = vadd.f32 %v1347, %v1352
  %v1356 = vrot.slane %v1350, 4
  %v1358 = vadd.f32 %v1350, %v1356
  %v1359 = vmul.f32 %v1354, 0.001953125
  %v1360 = vmul.f32 %v1358, 0.001953125
  %v1361 = vmul.f32 %v1359, %v1359
  %v1362 = vsub.f32 %v1360, %v1361
  %v1363 = vadd.f32 %v1362, 1e-05
  %v1364 = vrsqrt.pop %v1363
  %v1365 = vmul.f32 %v1157, %v1364
  %v1366 = vmul.f32 %v1359, %v1365
  %v1367 = vsub.f32 %v1162, %v1366
  %v1369 = vrot.slane %v1365, 4
  %v1371 = vsel %vm438, %v1365, %v1369
  %v1373 = vrot.slane %v1367, 4
  %v1375 = vsel %vm438, %v1367, %v1373
  %1377 = vset.pattern.permute.xlu0 0
  %1378 = vperm.xlu0 %1377, %v1371
  %v1379 = vpop.permute.xlu0 %1378
  %v1381 = vmul.f32 %v1335, %v1379
  %v1382 = vmul.f32 %v1337, %v1379
  %1384 = vset.pattern.permute.xlu0 0
  %1385 = vperm.xlu0 %1384, %v1375
  %v1386 = vpop.permute.xlu0 %1385
  %v1388 = vadd.f32 %v1381, %v1386
  %v1389 = vadd.f32 %v1382, %v1386
  %v1390 = vadd.f32 %v1388, %v904
  %v1391 = vadd.f32 %v1389, %v906
  %v1392 = vsub.f32 0.0, %v1390
  %v1393 = vsub.f32 0.0, %v1391
  %v1394 = vmul.f32 %v1392, 1.442695
  %v1395 = vpow.pop %v1394
  %v1396 = vmul.f32 %v1393, 1.442695
  %v1397 = vpow.pop %v1396
  %v1398 = vadd.f32 %v1395, 1.0
  %v1399 = vadd.f32 %v1397, 1.0
  %v1400 = vrcp.pop %v1398
  %v1401 = vrcp.pop %v1399
  %v1402 = vmul.f32 %v1390, %v1400
  %v1403 = vmul.f32 %v1391, %v1401
  %v1404 = vld [vmem:[%s5] sm:$0xff]
  %v1405 = vld [vmem:[%s5 + $0x8] sm:$0xff]
  %v1406 = vld [vmem:[%s5 + $0x10] sm:$0x3]
  %v1407 = vld [vmem:[%s5 + $0x18] sm:$0x3]
  %1408 = vrot.lane.b32.xlu0 %v1402, 17
  %v1409 = vpop.permute.xlu0 %1408
  %1410 = vrot.lane.b32.xlu0 %v1403, 17
  %v1411 = vpop.permute.xlu0 %1410
  %v1412 = vsel %vm918, %v1409, %v1411
  %v1413 = vsel %vm918, %v1411, %v1409
  %v1414 = vlaneseq
  %v1415 = vshrl.u32 %v1414, 7
  %v1416 = vsub.s32 0, %v1415
  %v1417 = vrot.slane %v1404, %v1416
  %v1418 = vlaneseq
  %v1419 = vshrl.u32 %v1418, 7
  %v1420 = vsub.s32 0, %v1419
  %v1421 = vrot.slane %v1405, %v1420
  %v1422 = vmul.f32 %v1413, %v1417
  %v1423 = vmul.f32 %v1412, %v1421
  %1424 = vrot.lane.b32.xlu0 %v1402, 16
  %v1425 = vpop.permute.xlu0 %1424
  %1426 = vrot.lane.b32.xlu0 %v1403, 16
  %v1427 = vpop.permute.xlu0 %1426
  %v1428 = vsel %vm935, %v1425, %v1427
  %v1429 = vsel %vm935, %v1427, %v1425
  %v1430 = vlaneseq
  %v1431 = vshrl.u32 %v1430, 7
  %v1432 = vsub.s32 1, %v1431
  %v1433 = vrot.slane %v1404, %v1432
  %v1434 = vlaneseq
  %v1435 = vshrl.u32 %v1434, 7
  %v1436 = vsub.s32 1, %v1435
  %v1437 = vrot.slane %v1405, %v1436
  %v1438 = vmul.f32 %v1429, %v1433
  %v1439 = vmul.f32 %v1428, %v1437
  %1440 = vrot.lane.b32.xlu0 %v1402, 15
  %v1441 = vpop.permute.xlu0 %1440
  %1442 = vrot.lane.b32.xlu0 %v1403, 15
  %v1443 = vpop.permute.xlu0 %1442
  %v1444 = vsel %vm952, %v1441, %v1443
  %v1445 = vsel %vm952, %v1443, %v1441
  %v1446 = vlaneseq
  %v1447 = vshrl.u32 %v1446, 7
  %v1448 = vsub.s32 2, %v1447
  %v1449 = vrot.slane %v1404, %v1448
  %v1450 = vlaneseq
  %v1451 = vshrl.u32 %v1450, 7
  %v1452 = vsub.s32 2, %v1451
  %v1453 = vrot.slane %v1405, %v1452
  %v1454 = vmul.f32 %v1445, %v1449
  %v1455 = vmul.f32 %v1444, %v1453
  %1456 = vrot.lane.b32.xlu0 %v1402, 1
  %v1457 = vpop.permute.xlu0 %1456
  %1458 = vrot.lane.b32.xlu0 %v1403, 1
  %v1459 = vpop.permute.xlu0 %1458
  %v1460 = vsel %vm239, %v1457, %v1459
  %v1461 = vsel %vm239, %v1459, %v1457
  %v1462 = vlaneseq
  %v1463 = vshrl.u32 %v1462, 7
  %v1464 = vsub.s32 3, %v1463
  %v1465 = vrot.slane %v1404, %v1464
  %v1466 = vlaneseq
  %v1467 = vshrl.u32 %v1466, 7
  %v1468 = vsub.s32 3, %v1467
  %v1469 = vrot.slane %v1405, %v1468
  %v1470 = vmul.f32 %v1461, %v1465
  %v1471 = vmul.f32 %v1460, %v1469
  %1472 = vrot.lane.b32.xlu0 %v1402, 127
  %v1473 = vpop.permute.xlu0 %1472
  %1474 = vrot.lane.b32.xlu0 %v1403, 127
  %v1475 = vpop.permute.xlu0 %1474
  %v1476 = vsel %vm256, %v1473, %v1475
  %v1477 = vsel %vm256, %v1475, %v1473
  %v1478 = vlaneseq
  %v1479 = vshrl.u32 %v1478, 7
  %v1480 = vsub.s32 5, %v1479
  %v1481 = vrot.slane %v1404, %v1480
  %v1482 = vlaneseq
  %v1483 = vshrl.u32 %v1482, 7
  %v1484 = vsub.s32 5, %v1483
  %v1485 = vrot.slane %v1405, %v1484
  %v1486 = vmul.f32 %v1476, %v1481
  %v1487 = vmul.f32 %v1477, %v1485
  %1488 = vrot.lane.b32.xlu0 %v1402, 113
  %v1489 = vpop.permute.xlu0 %1488
  %1490 = vrot.lane.b32.xlu0 %v1403, 113
  %v1491 = vpop.permute.xlu0 %1490
  %v1492 = vsel %vm1001, %v1489, %v1491
  %v1493 = vsel %vm1001, %v1491, %v1489
  %v1494 = vlaneseq
  %v1495 = vshrl.u32 %v1494, 7
  %v1496 = vsub.s32 6, %v1495
  %v1497 = vrot.slane %v1404, %v1496
  %v1498 = vlaneseq
  %v1499 = vshrl.u32 %v1498, 7
  %v1500 = vsub.s32 6, %v1499
  %v1501 = vrot.slane %v1405, %v1500
  %v1502 = vmul.f32 %v1492, %v1497
  %v1503 = vmul.f32 %v1493, %v1501
  %1504 = vrot.lane.b32.xlu0 %v1402, 112
  %v1505 = vpop.permute.xlu0 %1504
  %1506 = vrot.lane.b32.xlu0 %v1403, 112
  %v1507 = vpop.permute.xlu0 %1506
  %v1508 = vsel %vm1018, %v1505, %v1507
  %v1509 = vsel %vm1018, %v1507, %v1505
  %v1510 = vlaneseq
  %v1511 = vshrl.u32 %v1510, 7
  %v1512 = vsub.s32 7, %v1511
  %v1513 = vrot.slane %v1404, %v1512
  %v1514 = vlaneseq
  %v1515 = vshrl.u32 %v1514, 7
  %v1516 = vsub.s32 7, %v1515
  %v1517 = vrot.slane %v1405, %v1516
  %v1518 = vmul.f32 %v1508, %v1513
  %v1519 = vmul.f32 %v1509, %v1517
  %1520 = vrot.lane.b32.xlu0 %v1402, 111
  %v1521 = vpop.permute.xlu0 %1520
  %1522 = vrot.lane.b32.xlu0 %v1403, 111
  %v1523 = vpop.permute.xlu0 %1522
  %v1524 = vsel %vm1035, %v1521, %v1523
  %v1525 = vsel %vm1035, %v1523, %v1521
  %v1526 = vlaneseq
  %v1527 = vshrl.u32 %v1526, 7
  %v1528 = vsub.s32 0, %v1527
  %v1529 = vrot.slane %v1406, %v1528
  %v1530 = vlaneseq
  %v1531 = vshrl.u32 %v1530, 7
  %v1532 = vsub.s32 0, %v1531
  %v1533 = vrot.slane %v1407, %v1532
  %v1534 = vmul.f32 %v1524, %v1529
  %v1535 = vmul.f32 %v1525, %v1533
  %s1536 = scalar_lea.vmem %s6, 32
  %v1537 = vld [vmem:[%s1536] sm:$0xff]
  %v1539 = vsel %vm321, %v1537, 0
  %1541 = vmatprep.subr.mxu0 %v1423
  %1542 = vmatpush1.msra.mxu0 %v1422
  %1543 = vmatprep.subr.mxu0 %v1439
  %1544 = vmatpush1.msra.mxu0 %v1438
  %1545 = vmatprep.subr.mxu0 %v1455
  %1546 = vmatpush1.msra.mxu0 %v1454
  %1547 = vmatprep.subr.mxu0 %v1471
  %1548 = vmatpush1.msra.mxu0 %v1470
  %1549 = vmatprep.subr.mxu0 %v1403
  %1550 = vmatpush1.msra.mxu0 %v1402
  %1551 = vmatprep.subr.mxu0 %v1487
  %1552 = vmatpush1.msra.mxu0 %v1486
  %1553 = vmatprep.subr.mxu0 %v1503
  %1554 = vmatpush1.msra.mxu0 %v1502
  %1555 = vmatprep.subr.mxu0 %v1519
  %1556 = vmatpush1.msra.mxu0 %v1518
  %1557 = vmatprep.subr.mxu0 %v1535
  %1558 = vmatpush1.msra.mxu0 %v1534
  %1559 = vmatprep.subr.mxu0 0.0
  %1560 = vmatpush1.msra.mxu0 0.0
  %1561 = vmatprep.subr.mxu0 0.0
  %1562 = vmatpush1.msra.mxu0 0.0
  %1563 = vmatprep.subr.mxu0 0.0
  %1564 = vmatpush1.msra.mxu0 0.0
  %1565 = vmatprep.subr.mxu0 0.0
  %1566 = vmatpush1.msra.mxu0 0.0
  %1567 = vmatprep.subr.mxu0 0.0
  %1568 = vmatpush1.msra.mxu0 0.0
  %1569 = vmatprep.subr.mxu0 0.0
  %1570 = vmatpush1.msra.mxu0 0.0
  %1571 = vmatprep.subr.mxu0 0.0
  %1572 = vmatpush1.msra.mxu0 0.0
  %1573 = vmatprep.subr.mxu0 0.0
  %1574 = vmatpush1.msra.mxu0 0.0
  %1575 = vmatprep.subr.mxu0 0.0
  %1576 = vmatpush1.msra.mxu0 0.0
  %1577 = vmatprep.subr.mxu0 0.0
  %1578 = vmatpush1.msra.mxu0 0.0
  %1579 = vmatprep.subr.mxu0 0.0
  %1580 = vmatpush1.msra.mxu0 0.0
  %1581 = vmatprep.subr.mxu0 0.0
  %1582 = vmatpush1.msra.mxu0 0.0
  %1583 = vmatprep.subr.mxu0 0.0
  %1584 = vmatpush1.msra.mxu0 0.0
  %1585 = vmatprep.subr.mxu0 0.0
  %1586 = vmatpush1.msra.mxu0 0.0
  %1587 = vmatprep.subr.mxu0 0.0
  %1588 = vmatpush1.msra.mxu0 0.0
  %1589 = vmatprep.subr.mxu0 0.0
  %1590 = vmatpush1.msra.mxu0 0.0
  %1591 = vmatprep.subr.mxu0 0.0
  %1592 = vmatpush1.msra.mxu0 0.0
  %1593 = vmatprep.subr.mxu0 0.0
  %1594 = vmatpush1.msra.mxu0 0.0
  %1595 = vmatprep.subr.mxu0 0.0
  %1596 = vmatpush1.msra.mxu0 0.0
  %1597 = vmatprep.subr.mxu0 0.0
  %1598 = vmatpush1.msra.mxu0 0.0
  %1599 = vmatprep.subr.mxu0 0.0
  %1600 = vmatpush1.msra.mxu0 0.0
  %1601 = vmatprep.subr.mxu0 0.0
  %1602 = vmatpush1.msra.mxu0 0.0
  %1603 = vmatprep.subr.mxu0 0.0
  %1604 = vmatpush1.msra.mxu0 0.0
  %1605 = vmatprep.mubr.f32.mxu0 0.0
  %1606 = vmatmul.mubr.f32.gmra.mrb[0].mxu0 %v1539
  %v1607 = vpop.f32.mrb[0].mxu0
  %v1608 = vadd.f32 0.0, %v1607
  %v1609 = vpop.f32.mrb[0].mxu0
  %v1610 = vadd.f32 0.0, %v1609
  %1611 = vdwg.mxu0
  %v1612 = vmul.f32 %v1608, %v1608
  %v1613 = vmul.f32 %v1610, %v1610
  %v1614 = vlaneseq
  %v1615 = vshrl.u32 %v1614, 7
  %v1616 = vsub.s32 1, %v1615
  %v1617 = vrot.slane %v1406, %v1616
  %v1618 = vlaneseq
  %v1619 = vshrl.u32 %v1618, 7
  %v1620 = vsub.s32 1, %v1619
  %v1621 = vrot.slane %v1407, %v1620
  %v1622 = vmul.f32 %v1608, %v1617
  %v1623 = vmul.f32 %v1610, %v1621
  %v1624 = vmul.f32 %v1612, %v1617
  %v1625 = vmul.f32 %v1613, %v1621
  %v1626 = vadd.f32 %v1622, %v1623
  %1627 = vadd.xlane.f32.xlu0 %v1626
  %v1628 = vpop.xlane.xlu0 %1627
  %v1629 = vadd.f32 %v1624, %v1625
  %1630 = vadd.xlane.f32.xlu0 %v1629
  %v1631 = vpop.xlane.xlu0 %1630
  %v1633 = vrot.slane %v1628, 4
  %v1635 = vadd.f32 %v1628, %v1633
  %v1637 = vrot.slane %v1631, 4
  %v1639 = vadd.f32 %v1631, %v1637
  %v1640 = vmul.f32 %v1635, 0.001953125
  %v1641 = vmul.f32 %v1639, 0.001953125
  %v1642 = vmul.f32 %v1640, %v1640
  %v1643 = vsub.f32 %v1641, %v1642
  %s1644 = scalar_lea.vmem %s7, 8
  %v1645 = vld [vmem:[%s1644] sm:$0xf]
  %v1646 = vadd.f32 %v1643, 1e-05
  %v1647 = vrsqrt.pop %v1646
  %v1648 = vmul.f32 %v1645, %v1647
  %s1649 = scalar_lea.vmem %s8, 8
  %v1650 = vld [vmem:[%s1649] sm:$0xf]
  %v1651 = vmul.f32 %v1640, %v1648
  %v1652 = vsub.f32 %v1650, %v1651
  %v1654 = vrot.slane %v1648, 4
  %v1656 = vsel %vm438, %v1648, %v1654
  %v1658 = vrot.slane %v1652, 4
  %v1660 = vsel %vm438, %v1652, %v1658
  %1662 = vset.pattern.permute.xlu0 0
  %1663 = vperm.xlu0 %1662, %v1656
  %v1664 = vpop.permute.xlu0 %1663
  %v1666 = vmul.f32 %v1608, %v1664
  %v1667 = vmul.f32 %v1610, %v1664
  %1669 = vset.pattern.permute.xlu0 0
  %1670 = vperm.xlu0 %1669, %v1660
  %v1671 = vpop.permute.xlu0 %1670
  %v1673 = vadd.f32 %v1666, %v1671
  %v1674 = vadd.f32 %v1667, %v1671
  %v1675 = vsub.f32 0.0, %v1673
  %v1676 = vsub.f32 0.0, %v1674
  %v1677 = vmul.f32 %v1675, 1.442695
  %v1678 = vpow.pop %v1677
  %v1679 = vmul.f32 %v1676, 1.442695
  %v1680 = vpow.pop %v1679
  %v1681 = vadd.f32 %v1678, 1.0
  %v1682 = vadd.f32 %v1680, 1.0
  %v1683 = vrcp.pop %v1681
  %v1684 = vrcp.pop %v1682
  %v1685 = vmul.f32 %v1673, %v1683
  %v1686 = vmul.f32 %v1674, %v1684
  %1687 = vrot.lane.b32.xlu0 %v1685, 17
  %v1688 = vpop.permute.xlu0 %1687
  %1689 = vrot.lane.b32.xlu0 %v1686, 17
  %v1690 = vpop.permute.xlu0 %1689
  %v1691 = vsel %vm918, %v1688, %v1690
  %v1692 = vsel %vm918, %v1690, %v1688
  %v1693 = vmul.f32 %v1692, %v1417
  %v1694 = vmul.f32 %v1691, %v1421
  %1695 = vrot.lane.b32.xlu0 %v1685, 16
  %v1696 = vpop.permute.xlu0 %1695
  %1697 = vrot.lane.b32.xlu0 %v1686, 16
  %v1698 = vpop.permute.xlu0 %1697
  %v1699 = vsel %vm935, %v1696, %v1698
  %v1700 = vsel %vm935, %v1698, %v1696
  %v1701 = vmul.f32 %v1700, %v1433
  %v1702 = vmul.f32 %v1699, %v1437
  %1703 = vrot.lane.b32.xlu0 %v1685, 15
  %v1704 = vpop.permute.xlu0 %1703
  %1705 = vrot.lane.b32.xlu0 %v1686, 15
  %v1706 = vpop.permute.xlu0 %1705
  %v1707 = vsel %vm952, %v1704, %v1706
  %v1708 = vsel %vm952, %v1706, %v1704
  %v1709 = vmul.f32 %v1708, %v1449
  %v1710 = vmul.f32 %v1707, %v1453
  %1711 = vrot.lane.b32.xlu0 %v1685, 1
  %v1712 = vpop.permute.xlu0 %1711
  %1713 = vrot.lane.b32.xlu0 %v1686, 1
  %v1714 = vpop.permute.xlu0 %1713
  %v1715 = vsel %vm239, %v1712, %v1714
  %v1716 = vsel %vm239, %v1714, %v1712
  %v1717 = vmul.f32 %v1716, %v1465
  %v1718 = vmul.f32 %v1715, %v1469
  %1719 = vrot.lane.b32.xlu0 %v1685, 127
  %v1720 = vpop.permute.xlu0 %1719
  %1721 = vrot.lane.b32.xlu0 %v1686, 127
  %v1722 = vpop.permute.xlu0 %1721
  %v1723 = vsel %vm256, %v1720, %v1722
  %v1724 = vsel %vm256, %v1722, %v1720
  %v1725 = vmul.f32 %v1723, %v1481
  %v1726 = vmul.f32 %v1724, %v1485
  %1727 = vrot.lane.b32.xlu0 %v1685, 113
  %v1728 = vpop.permute.xlu0 %1727
  %1729 = vrot.lane.b32.xlu0 %v1686, 113
  %v1730 = vpop.permute.xlu0 %1729
  %v1731 = vsel %vm1001, %v1728, %v1730
  %v1732 = vsel %vm1001, %v1730, %v1728
  %v1733 = vmul.f32 %v1731, %v1497
  %v1734 = vmul.f32 %v1732, %v1501
  %1735 = vrot.lane.b32.xlu0 %v1685, 112
  %v1736 = vpop.permute.xlu0 %1735
  %1737 = vrot.lane.b32.xlu0 %v1686, 112
  %v1738 = vpop.permute.xlu0 %1737
  %v1739 = vsel %vm1018, %v1736, %v1738
  %v1740 = vsel %vm1018, %v1738, %v1736
  %v1741 = vmul.f32 %v1739, %v1513
  %v1742 = vmul.f32 %v1740, %v1517
  %1743 = vrot.lane.b32.xlu0 %v1685, 111
  %v1744 = vpop.permute.xlu0 %1743
  %1745 = vrot.lane.b32.xlu0 %v1686, 111
  %v1746 = vpop.permute.xlu0 %1745
  %v1747 = vsel %vm1035, %v1744, %v1746
  %v1748 = vsel %vm1035, %v1746, %v1744
  %v1749 = vmul.f32 %v1747, %v1529
  %v1750 = vmul.f32 %v1748, %v1533
  %s1751 = scalar_lea.vmem %s6, 40
  %v1752 = vld [vmem:[%s1751] sm:$0xff]
  %v1754 = vsel %vm321, %v1752, 0
  %1756 = vmatprep.subr.mxu0 %v1694
  %1757 = vmatpush1.msra.mxu0 %v1693
  %1758 = vmatprep.subr.mxu0 %v1702
  %1759 = vmatpush1.msra.mxu0 %v1701
  %1760 = vmatprep.subr.mxu0 %v1710
  %1761 = vmatpush1.msra.mxu0 %v1709
  %1762 = vmatprep.subr.mxu0 %v1718
  %1763 = vmatpush1.msra.mxu0 %v1717
  %1764 = vmatprep.subr.mxu0 %v1686
  %1765 = vmatpush1.msra.mxu0 %v1685
  %1766 = vmatprep.subr.mxu0 %v1726
  %1767 = vmatpush1.msra.mxu0 %v1725
  %1768 = vmatprep.subr.mxu0 %v1734
  %1769 = vmatpush1.msra.mxu0 %v1733
  %1770 = vmatprep.subr.mxu0 %v1742
  %1771 = vmatpush1.msra.mxu0 %v1741
  %1772 = vmatprep.subr.mxu0 %v1750
  %1773 = vmatpush1.msra.mxu0 %v1749
  %1774 = vmatprep.subr.mxu0 0.0
  %1775 = vmatpush1.msra.mxu0 0.0
  %1776 = vmatprep.subr.mxu0 0.0
  %1777 = vmatpush1.msra.mxu0 0.0
  %1778 = vmatprep.subr.mxu0 0.0
  %1779 = vmatpush1.msra.mxu0 0.0
  %1780 = vmatprep.subr.mxu0 0.0
  %1781 = vmatpush1.msra.mxu0 0.0
  %1782 = vmatprep.subr.mxu0 0.0
  %1783 = vmatpush1.msra.mxu0 0.0
  %1784 = vmatprep.subr.mxu0 0.0
  %1785 = vmatpush1.msra.mxu0 0.0
  %1786 = vmatprep.subr.mxu0 0.0
  %1787 = vmatpush1.msra.mxu0 0.0
  %1788 = vmatprep.subr.mxu0 0.0
  %1789 = vmatpush1.msra.mxu0 0.0
  %1790 = vmatprep.subr.mxu0 0.0
  %1791 = vmatpush1.msra.mxu0 0.0
  %1792 = vmatprep.subr.mxu0 0.0
  %1793 = vmatpush1.msra.mxu0 0.0
  %1794 = vmatprep.subr.mxu0 0.0
  %1795 = vmatpush1.msra.mxu0 0.0
  %1796 = vmatprep.subr.mxu0 0.0
  %1797 = vmatpush1.msra.mxu0 0.0
  %1798 = vmatprep.subr.mxu0 0.0
  %1799 = vmatpush1.msra.mxu0 0.0
  %1800 = vmatprep.subr.mxu0 0.0
  %1801 = vmatpush1.msra.mxu0 0.0
  %1802 = vmatprep.subr.mxu0 0.0
  %1803 = vmatpush1.msra.mxu0 0.0
  %1804 = vmatprep.subr.mxu0 0.0
  %1805 = vmatpush1.msra.mxu0 0.0
  %1806 = vmatprep.subr.mxu0 0.0
  %1807 = vmatpush1.msra.mxu0 0.0
  %1808 = vmatprep.subr.mxu0 0.0
  %1809 = vmatpush1.msra.mxu0 0.0
  %1810 = vmatprep.subr.mxu0 0.0
  %1811 = vmatpush1.msra.mxu0 0.0
  %1812 = vmatprep.subr.mxu0 0.0
  %1813 = vmatpush1.msra.mxu0 0.0
  %1814 = vmatprep.subr.mxu0 0.0
  %1815 = vmatpush1.msra.mxu0 0.0
  %1816 = vmatprep.subr.mxu0 0.0
  %1817 = vmatpush1.msra.mxu0 0.0
  %1818 = vmatprep.subr.mxu0 0.0
  %1819 = vmatpush1.msra.mxu0 0.0
  %1820 = vmatprep.mubr.f32.mxu0 0.0
  %1821 = vmatmul.mubr.f32.gmra.mrb[0].mxu0 %v1754
  %v1822 = vpop.f32.mrb[0].mxu0
  %v1823 = vadd.f32 0.0, %v1822
  %v1824 = vpop.f32.mrb[0].mxu0
  %v1825 = vadd.f32 0.0, %v1824
  %1826 = vdwg.mxu0
  %v1827 = vmul.f32 %v1823, %v1823
  %v1828 = vmul.f32 %v1825, %v1825
  %v1829 = vmul.f32 %v1823, %v1617
  %v1830 = vmul.f32 %v1825, %v1621
  %v1831 = vmul.f32 %v1827, %v1617
  %v1832 = vmul.f32 %v1828, %v1621
  %v1833 = vadd.f32 %v1829, %v1830
  %1834 = vadd.xlane.f32.xlu0 %v1833
  %v1835 = vpop.xlane.xlu0 %1834
  %v1836 = vadd.f32 %v1831, %v1832
  %1837 = vadd.xlane.f32.xlu0 %v1836
  %v1838 = vpop.xlane.xlu0 %1837
  %v1840 = vrot.slane %v1835, 4
  %v1842 = vadd.f32 %v1835, %v1840
  %v1844 = vrot.slane %v1838, 4
  %v1846 = vadd.f32 %v1838, %v1844
  %v1847 = vmul.f32 %v1842, 0.001953125
  %v1848 = vmul.f32 %v1846, 0.001953125
  %v1849 = vmul.f32 %v1847, %v1847
  %v1850 = vsub.f32 %v1848, %v1849
  %v1851 = vadd.f32 %v1850, 1e-05
  %v1852 = vrsqrt.pop %v1851
  %v1853 = vmul.f32 %v1645, %v1852
  %v1854 = vmul.f32 %v1847, %v1853
  %v1855 = vsub.f32 %v1650, %v1854
  %v1857 = vrot.slane %v1853, 4
  %v1859 = vsel %vm438, %v1853, %v1857
  %v1861 = vrot.slane %v1855, 4
  %v1863 = vsel %vm438, %v1855, %v1861
  %1865 = vset.pattern.permute.xlu0 0
  %1866 = vperm.xlu0 %1865, %v1859
  %v1867 = vpop.permute.xlu0 %1866
  %v1869 = vmul.f32 %v1823, %v1867
  %v1870 = vmul.f32 %v1825, %v1867
  %1872 = vset.pattern.permute.xlu0 0
  %1873 = vperm.xlu0 %1872, %v1863
  %v1874 = vpop.permute.xlu0 %1873
  %v1876 = vadd.f32 %v1869, %v1874
  %v1877 = vadd.f32 %v1870, %v1874
  %v1878 = vadd.f32 %v1876, %v1402
  %v1879 = vadd.f32 %v1877, %v1403
  %v1880 = vsub.f32 0.0, %v1878
  %v1881 = vsub.f32 0.0, %v1879
  %v1882 = vmul.f32 %v1880, 1.442695
  %v1883 = vpow.pop %v1882
  %v1884 = vmul.f32 %v1881, 1.442695
  %v1885 = vpow.pop %v1884
  %v1886 = vadd.f32 %v1883, 1.0
  %v1887 = vadd.f32 %v1885, 1.0
  %v1888 = vrcp.pop %v1886
  %v1889 = vrcp.pop %v1887
  %v1890 = vmul.f32 %v1878, %v1888
  %v1891 = vmul.f32 %v1879, %v1889
  %v1892 = vld [vmem:[%s9] sm:$0x3f]
  %v1893 = vld [vmem:[%s10] sm:$0x3f]
  %1895 = vset.pattern.permute.xlu0 0
  %1896 = vperm.xlu0 %1895, %v1893
  %v1897 = vpop.permute.xlu0 %1896
  %vm1899 = vcmask 64512
  %v1901 = vsel %vm1899, %v1892, 0
  %1903 = vmatprep.subr.mxu0 %v1891
  %1904 = vmatpush1.msra.mxu0 %v1890
  %1905 = vmatprep.subr.mxu0 0.0
  %1906 = vmatpush1.msra.mxu0 0.0
  %1907 = vmatprep.subr.mxu0 0.0
  %1908 = vmatpush1.msra.mxu0 0.0
  %1909 = vmatprep.subr.mxu0 0.0
  %1910 = vmatpush1.msra.mxu0 0.0
  %1911 = vmatprep.subr.mxu0 0.0
  %1912 = vmatpush1.msra.mxu0 0.0
  %1913 = vmatprep.subr.mxu0 0.0
  %1914 = vmatpush1.msra.mxu0 0.0
  %1915 = vmatprep.subr.mxu0 0.0
  %1916 = vmatpush1.msra.mxu0 0.0
  %1917 = vmatprep.subr.mxu0 0.0
  %1918 = vmatpush1.msra.mxu0 0.0
  %1919 = vmatprep.subr.mxu0 0.0
  %1920 = vmatpush1.msra.mxu0 0.0
  %1921 = vmatprep.subr.mxu0 0.0
  %1922 = vmatpush1.msra.mxu0 0.0
  %1923 = vmatprep.subr.mxu0 0.0
  %1924 = vmatpush1.msra.mxu0 0.0
  %1925 = vmatprep.subr.mxu0 0.0
  %1926 = vmatpush1.msra.mxu0 0.0
  %1927 = vmatprep.subr.mxu0 0.0
  %1928 = vmatpush1.msra.mxu0 0.0
  %1929 = vmatprep.subr.mxu0 0.0
  %1930 = vmatpush1.msra.mxu0 0.0
  %1931 = vmatprep.subr.mxu0 0.0
  %1932 = vmatpush1.msra.mxu0 0.0
  %1933 = vmatprep.subr.mxu0 0.0
  %1934 = vmatpush1.msra.mxu0 0.0
  %1935 = vmatprep.subr.mxu0 0.0
  %1936 = vmatpush1.msra.mxu0 0.0
  %1937 = vmatprep.subr.mxu0 0.0
  %1938 = vmatpush1.msra.mxu0 0.0
  %1939 = vmatprep.subr.mxu0 0.0
  %1940 = vmatpush1.msra.mxu0 0.0
  %1941 = vmatprep.subr.mxu0 0.0
  %1942 = vmatpush1.msra.mxu0 0.0
  %1943 = vmatprep.subr.mxu0 0.0
  %1944 = vmatpush1.msra.mxu0 0.0
  %1945 = vmatprep.subr.mxu0 0.0
  %1946 = vmatpush1.msra.mxu0 0.0
  %1947 = vmatprep.subr.mxu0 0.0
  %1948 = vmatpush1.msra.mxu0 0.0
  %1949 = vmatprep.subr.mxu0 0.0
  %1950 = vmatpush1.msra.mxu0 0.0
  %1951 = vmatprep.subr.mxu0 0.0
  %1952 = vmatpush1.msra.mxu0 0.0
  %1953 = vmatprep.subr.mxu0 0.0
  %1954 = vmatpush1.msra.mxu0 0.0
  %1955 = vmatprep.subr.mxu0 0.0
  %1956 = vmatpush1.msra.mxu0 0.0
  %1957 = vmatprep.subr.mxu0 0.0
  %1958 = vmatpush1.msra.mxu0 0.0
  %1959 = vmatprep.subr.mxu0 0.0
  %1960 = vmatpush1.msra.mxu0 0.0
  %1961 = vmatprep.subr.mxu0 0.0
  %1962 = vmatpush1.msra.mxu0 0.0
  %1963 = vmatprep.subr.mxu0 0.0
  %1964 = vmatpush1.msra.mxu0 0.0
  %1965 = vmatprep.subr.mxu0 0.0
  %1966 = vmatpush1.msra.mxu0 0.0
  %1967 = vmatprep.mubr.f32.mxu0 0.0
  %1968 = vmatmul.mubr.f32.gmra.mrb[0].mxu0 %v1901
  %v1969 = vpop.f32.mrb[0].mxu0
  %v1970 = vadd.f32 %v1897, %v1969
  %v1971 = vpop.f32.mrb[0].mxu0
  %v1972 = vadd.f32 %v1897, %v1971
  %1973 = vdwg.mxu0
  %1974 = vst [vmem:[%s11] sm:$0x3f] %v1970
  %1975 = vst [vmem:[%s11 + $0x8] sm:$0x3f] %v1972
  // Predicated region
  $region46: #{_lambda_.1} parent=0 // pred_check
    _
  $region47: #{_lambda_.1} parent=0 // pred_check_branch
    %1977 = sbr.rel (0) target = $region49
  $region48: #{_lambda_.1} parent=0 // pred_region
    _
  $region49: #{_lambda_.1} parent=0 // pred_fallthru
    _
  // Predicated region
  $region50: #{_lambda_.1} parent=0 // pred_check
    _
  $region51: #{_lambda_.1} parent=0 // pred_check_branch
    %1979 = sbr.rel (0) target = $region53
  $region52: #{_lambda_.1} parent=0 // pred_region
    _
  $region53: #{_lambda_.1} parent=0 // pred_fallthru
    _

</llo_original>
